<compile_context>
chip_gen: v7x
topology: tpu7x:2x2x1
jax: 0.10.0
libtpu: 0.0.40
codegen_flags: <defaults>
</compile_context>

<pallas_src>
import jax
import jax.numpy as jnp
from jax.experimental import pallas as pl
from jax.experimental.pallas import tpu as pltpu
import numpy as np

NDIM = 2                 # spatial encoder output size / number of coordinate dims
N_HIDDEN_LAYERS = 4      # lisl MLP hidden-layer count used by MatchingNetwork


def _round_up(x, m):
    return ((x + m - 1) // m) * m


def matching_kernel(x_ref,
                    sem_w0, sem_b0, sem_wh, sem_bh, sem_wo, sem_bo,
                    spa_w0, spa_b0, spa_wh, spa_bh, spa_wo, spa_bo,
                    sem_out_ref, spa_out_ref):
    """Feature-major (transposed) dual-MLP forward on one lane tile of rows.

    x_ref:       (F, T)       packed input tile, rows = [coords (2) | z (C)], f32
    *_w0:        (H, C)       transposed first-layer weight      (compute dtype)
    *_b0:        (H, 1)       first-layer bias                   (f32)
    *_wh:        (L, H, H)    transposed hidden-layer weights    (compute dtype)
    *_bh:        (L, H, 1)    hidden-layer biases                (f32)
    *_wo:        (Dout, H)    transposed output-layer weight     (compute dtype)
    *_bo:        (Dout, 1)    output-layer bias                  (f32)
    sem_out_ref: (out_channels, T) f32
    spa_out_ref: (NDIM, T)         f32
    """
    x = x_ref[...]                               # (F, T) f32
    coords = x[:NDIM, :]                         # (NDIM, T) f32 (exact residual)
    z = x[NDIM:, :].astype(sem_w0.dtype)         # (C, T) compute dtype

    def mlp(w0, b0, wh, bh, wo, bo):
        h = jnp.dot(w0[...], z, preferred_element_type=jnp.float32) + b0[...]
        h = jnp.maximum(h, 0.0)
        # Dropout(p=0.1) is identity in eval-mode forward.
        for l in range(N_HIDDEN_LAYERS):
            h = jnp.dot(wh[l], h.astype(wh.dtype),
                        preferred_element_type=jnp.float32) + bh[l]
            h = jnp.maximum(h, 0.0)
        return jnp.dot(wo[...], h.astype(wo.dtype),
                       preferred_element_type=jnp.float32) + bo[...]

    sem = mlp(sem_w0, sem_b0, sem_wh, sem_bh, sem_wo, sem_bo)   # (out_channels, T)
    spa = mlp(spa_w0, spa_b0, spa_wh, spa_bh, spa_wo, spa_bo)   # (NDIM, T)

    sem_out_ref[...] = sem.astype(sem_out_ref.dtype)
    spa_out_ref[...] = (spa + coords).astype(spa_out_ref.dtype)


def init_params(key, in_channels, out_channels, hidden_size):
    """Deterministic synthetic parameters (shapes follow nn.Linear layers of the MLPs)."""
    ks = jax.random.split(key, 12)
    scale = 0.1

    def w(k, shape):
        return (scale * jax.random.normal(k, shape)).astype(jnp.float32)

    H = hidden_size
    params = {
        # semantic encoder: in -> H -> (H)x4 -> out_channels
        "sem_w0": w(ks[0], (in_channels, H)),
        "sem_b0": w(ks[1], (1, H)),
        "sem_wh": w(ks[2], (N_HIDDEN_LAYERS, H, H)),
        "sem_bh": w(ks[3], (N_HIDDEN_LAYERS, 1, H)),
        "sem_wo": w(ks[4], (H, out_channels)),
        "sem_bo": w(ks[5], (1, out_channels)),
        # spatial encoder: in -> H -> (H)x4 -> NDIM
        "spa_w0": w(ks[6], (in_channels, H)),
        "spa_b0": w(ks[7], (1, H)),
        "spa_wh": w(ks[8], (N_HIDDEN_LAYERS, H, H)),
        "spa_bh": w(ks[9], (N_HIDDEN_LAYERS, 1, H)),
        "spa_wo": w(ks[10], (H, NDIM)),
        "spa_bo": w(ks[11], (1, NDIM)),
    }
    return params


def _prep_weights(params, compute_dtype):
    """Transpose weights to feature-major orientation; biases become column vectors."""
    def tt(a):
        return jnp.swapaxes(a, -1, -2)

    out = []
    for pre in ("sem", "spa"):
        out += [
            tt(params[pre + "_w0"]).astype(compute_dtype),   # (H, C)
            tt(params[pre + "_b0"]).astype(jnp.float32),     # (H, 1)
            tt(params[pre + "_wh"]).astype(compute_dtype),   # (L, H, H)
            tt(params[pre + "_bh"]).astype(jnp.float32),     # (L, H, 1)
            tt(params[pre + "_wo"]).astype(compute_dtype),   # (Dout, H)
            tt(params[pre + "_bo"]).astype(jnp.float32),     # (Dout, 1)
        ]
    return out


def _choose_tile(M, tile_rows):
    """Lane-tile size: multiple of 128, clamped for small M, >=2 grid steps for
    moderate M so a dual-TensorCore chip (v7x) has work on both cores."""
    m128 = _round_up(max(M, 1), 128)
    tile = min(_round_up(int(tile_rows), 128), m128)
    if m128 >= 256 and m128 < 2 * tile:
        tile = _round_up((m128 + 1) // 2, 128)
    return tile


def _vmem_limit(weight_arrays, tile, F, H, out_total):
    """Derive vmem_limit_bytes from the actual footprint (weights possibly
    double-buffered by the pipeline, 2x I/O row blocks, live activations)."""
    wbytes = sum(int(a.size) * a.dtype.itemsize for a in weight_arrays)
    io_bytes = (F + out_total) * tile * 4
    act_bytes = 4 * H * tile * 4
    needed = 2 * wbytes + 2 * io_bytes + act_bytes + (8 << 20)
    return int(min(max(needed, 16 << 20), 100 << 20))


def matching_network_forward(inputs, params, *, tile_rows=1024,
                             compute_dtype=jnp.float32):
    """Pallas implementation of MatchingNetwork.forward.

    inputs: (B, N, NDIM + in_channels) float32
    returns (semantic_embeddings (B, N, out_channels), spatial_embeddings (B, N, NDIM))
    """
    B, N, F = inputs.shape
    C = F - NDIM
    M = B * N

    H = params["sem_b0"].shape[-1]
    out_channels = params["sem_bo"].shape[-1]

    tile = _choose_tile(M, tile_rows)
    M_pad = _round_up(M, tile)
    grid = (M_pad // tile,)

    # Feature-major input slab: the small feature axis (F = NDIM + C) sits in
    # sublanes, the B*N rows sit in lanes -> lane-dense loads/stores in-kernel.
    xT = inputs.reshape(M, F).T.astype(jnp.float32)            # (F, M)
    if M_pad != M:
        xT = jnp.pad(xT, ((0, 0), (0, M_pad - M)))

    weights = _prep_weights(params, compute_dtype)

    # Input row tile + grid-invariant weights (constant index maps -> fetched once).
    in_specs = [pl.BlockSpec((F, tile), lambda i: (0, i))]
    for dout in (out_channels, NDIM):                          # semantic, spatial chains
        in_specs += [
            pl.BlockSpec((H, C), lambda i: (0, 0)),
            pl.BlockSpec((H, 1), lambda i: (0, 0)),
            pl.BlockSpec((N_HIDDEN_LAYERS, H, H), lambda i: (0, 0, 0)),
            pl.BlockSpec((N_HIDDEN_LAYERS, H, 1), lambda i: (0, 0, 0)),
            pl.BlockSpec((dout, H), lambda i: (0, 0)),
            pl.BlockSpec((dout, 1), lambda i: (0, 0)),
        ]

    out_specs = [
        pl.BlockSpec((out_channels, tile), lambda i: (0, i)),
        pl.BlockSpec((NDIM, tile), lambda i: (0, i)),
    ]
    out_shape = (
        jax.ShapeDtypeStruct((out_channels, M_pad), jnp.float32),
        jax.ShapeDtypeStruct((NDIM, M_pad), jnp.float32),
    )

    sem_t, spa_t = pl.pallas_call(
        matching_kernel,
        out_shape=out_shape,
        grid_spec=pl.GridSpec(grid=grid, in_specs=in_specs, out_specs=out_specs),
        compiler_params=pltpu.CompilerParams(
            dimension_semantics=("parallel",),   # shards grid steps across v7x's 2 TCs
            vmem_limit_bytes=_vmem_limit(weights, tile, F, H, out_channels + NDIM),
        ),
    )(xT, *weights)

    semantic_embeddings = sem_t[:, :M].T.reshape(B, N, out_channels)
    spatial_embeddings = spa_t[:, :M].T.reshape(B, N, NDIM)
    return semantic_embeddings, spatial_embeddings


def matching_network_reference(inputs, params):
    """Pure-JAX reference (mirrors the PyTorch eval-mode forward)."""
    B, N, F = inputs.shape
    C = F - NDIM
    coords = inputs[..., :NDIM].reshape(-1, NDIM)
    z = inputs[..., NDIM:].reshape(-1, C)

    def mlp(x, p, pre):
        h = jnp.maximum(x @ p[pre + "_w0"] + p[pre + "_b0"], 0.0)
        for l in range(N_HIDDEN_LAYERS):
            h = jnp.maximum(h @ p[pre + "_wh"][l] + p[pre + "_bh"][l], 0.0)
        return h @ p[pre + "_wo"] + p[pre + "_bo"]

    sem = mlp(z, params, "sem").reshape(B, N, -1)
    spa = (mlp(z, params, "spa") + coords).reshape(B, N, -1)
    return sem, spa


if __name__ == "__main__":
    # Small shapes consistent with the module's forward:
    # inputs: (batch=2, seq=8, NDIM + in_channels = 2 + 4 = 6)
    batch, seq = 2, 8
    in_channels, out_channels, hidden_size = 4, 3, 32

    key = jax.random.PRNGKey(0)
    k_in, k_par = jax.random.split(key)
    inputs = jax.random.normal(k_in, (batch, seq, NDIM + in_channels), dtype=jnp.float32)
    params = init_params(k_par, in_channels, out_channels, hidden_size)

    sem, spa = matching_network_forward(inputs, params)
    sem, spa = jax.block_until_ready((sem, spa))

    sem_ref, spa_ref = matching_network_reference(inputs, params)
    np.testing.assert_allclose(np.asarray(sem), np.asarray(sem_ref), rtol=1e-5, atol=1e-5)
    np.testing.assert_allclose(np.asarray(spa), np.asarray(spa_ref), rtol=1e-5, atol=1e-5)
    assert sem.shape == (batch, seq, out_channels)
    assert spa.shape == (batch, seq, NDIM)

    # bf16 compute path (recommended default on v6e/v7x): same kernel with bf16
    # weights/activations, f32 accumulation and f32 coordinate residual.
    sem16, spa16 = matching_network_forward(inputs, params, compute_dtype=jnp.bfloat16)
    sem16, spa16 = jax.block_until_ready((sem16, spa16))
    np.testing.assert_allclose(np.asarray(sem16), np.asarray(sem_ref), rtol=3e-2, atol=3e-2)
    np.testing.assert_allclose(np.asarray(spa16), np.asarray(spa_ref), rtol=3e-2, atol=3e-2)

    print("KERNEL_OK")
</pallas_src>

<mosaic_0001>
module attributes {stable_mosaic.version = 11 : i64} {
  func.func @matching_kernel(%arg0: i32, %arg1: memref<6x128xf32, #tpu.memory_space<vmem>>, %arg2: memref<32x4xf32, #tpu.memory_space<vmem>>, %arg3: memref<32x1xf32, #tpu.memory_space<vmem>>, %arg4: memref<4x32x32xf32, #tpu.memory_space<vmem>>, %arg5: memref<4x32x1xf32, #tpu.memory_space<vmem>>, %arg6: memref<3x32xf32, #tpu.memory_space<vmem>>, %arg7: memref<3x1xf32, #tpu.memory_space<vmem>>, %arg8: memref<32x4xf32, #tpu.memory_space<vmem>>, %arg9: memref<32x1xf32, #tpu.memory_space<vmem>>, %arg10: memref<4x32x32xf32, #tpu.memory_space<vmem>>, %arg11: memref<4x32x1xf32, #tpu.memory_space<vmem>>, %arg12: memref<2x32xf32, #tpu.memory_space<vmem>>, %arg13: memref<2x1xf32, #tpu.memory_space<vmem>>, %arg14: memref<3x128xf32, #tpu.memory_space<vmem>>, %arg15: memref<2x128xf32, #tpu.memory_space<vmem>>) attributes {dimension_semantics = [#tpu.dimension_semantics<parallel>], iteration_bounds = array<i64: 1>, scalar_prefetch = 0 : i64, scratch_operands = 0 : i64, tpu.core_type = #tpu.core_type<tc>, window_params = [{transform_indices = @transform_0, window_bounds = array<i64: 6, 128>}, {pipeline_mode = #tpu.pipeline_mode<synchronous>, transform_indices = @transform_1, window_bounds = array<i64: 32, 4>}, {pipeline_mode = #tpu.pipeline_mode<synchronous>, transform_indices = @transform_2, window_bounds = array<i64: 32, 1>}, {pipeline_mode = #tpu.pipeline_mode<synchronous>, transform_indices = @transform_3, window_bounds = array<i64: 4, 32, 32>}, {pipeline_mode = #tpu.pipeline_mode<synchronous>, transform_indices = @transform_4, window_bounds = array<i64: 4, 32, 1>}, {pipeline_mode = #tpu.pipeline_mode<synchronous>, transform_indices = @transform_5, window_bounds = array<i64: 3, 32>}, {pipeline_mode = #tpu.pipeline_mode<synchronous>, transform_indices = @transform_6, window_bounds = array<i64: 3, 1>}, {pipeline_mode = #tpu.pipeline_mode<synchronous>, transform_indices = @transform_7, window_bounds = array<i64: 32, 4>}, {pipeline_mode = #tpu.pipeline_mode<synchronous>, transform_indices = @transform_8, window_bounds = array<i64: 32, 1>}, {pipeline_mode = #tpu.pipeline_mode<synchronous>, transform_indices = @transform_9, window_bounds = array<i64: 4, 32, 32>}, {pipeline_mode = #tpu.pipeline_mode<synchronous>, transform_indices = @transform_10, window_bounds = array<i64: 4, 32, 1>}, {pipeline_mode = #tpu.pipeline_mode<synchronous>, transform_indices = @transform_11, window_bounds = array<i64: 2, 32>}, {pipeline_mode = #tpu.pipeline_mode<synchronous>, transform_indices = @transform_12, window_bounds = array<i64: 2, 1>}, {transform_indices = @transform_13, window_bounds = array<i64: 3, 128>}, {transform_indices = @transform_14, window_bounds = array<i64: 2, 128>}]} {
    %c0 = arith.constant 0 : index
    %c0_0 = arith.constant 0 : index
    %0 = vector.load %arg1[%c0, %c0_0] : memref<6x128xf32, #tpu.memory_space<vmem>>, vector<6x128xf32>
    %1 = vector.extract_strided_slice %0 {offsets = [0, 0], sizes = [2, 128], strides = [1, 1]} : vector<6x128xf32> to vector<2x128xf32>
    %2 = vector.extract_strided_slice %0 {offsets = [2, 0], sizes = [4, 128], strides = [1, 1]} : vector<6x128xf32> to vector<4x128xf32>
    %c0_1 = arith.constant 0 : index
    %c0_2 = arith.constant 0 : index
    %3 = vector.load %arg2[%c0_1, %c0_2] : memref<32x4xf32, #tpu.memory_space<vmem>>, vector<32x4xf32>
    %cst = arith.constant dense<0.000000e+00> : vector<32x128xf32>
    %4 = tpu.matmul %3, %2, %cst {dimension_numbers = #tpu.dot_dimension_numbers<[1], [0], [0], [1], [0, 0, 1, 1], [], []>} : vector<32x4xf32>, vector<4x128xf32>, vector<32x128xf32> -> vector<32x128xf32>
    %c0_3 = arith.constant 0 : index
    %c0_4 = arith.constant 0 : index
    %5 = vector.load %arg3[%c0_3, %c0_4] : memref<32x1xf32, #tpu.memory_space<vmem>>, vector<32x1xf32>
    %6 = vector.broadcast %5 : vector<32x1xf32> to vector<32x128xf32>
    %7 = arith.addf %4, %6 : vector<32x128xf32>
    %cst_5 = arith.constant 0.000000e+00 : f32
    %8 = vector.broadcast %cst_5 : f32 to vector<32x128xf32>
    %9 = arith.maximumf %7, %8 : vector<32x128xf32>
    %c0_6 = arith.constant 0 : index
    %c0_7 = arith.constant 0 : index
    %c0_8 = arith.constant 0 : index
    %10 = vector.load %arg4[%c0_6, %c0_7, %c0_8] : memref<4x32x32xf32, #tpu.memory_space<vmem>>, vector<1x32x32xf32>
    %11 = vector.shape_cast %10 : vector<1x32x32xf32> to vector<32x32xf32>
    %cst_9 = arith.constant dense<0.000000e+00> : vector<32x128xf32>
    %12 = tpu.matmul %11, %9, %cst_9 {dimension_numbers = #tpu.dot_dimension_numbers<[1], [0], [0], [1], [0, 0, 1, 1], [], []>} : vector<32x32xf32>, vector<32x128xf32>, vector<32x128xf32> -> vector<32x128xf32>
    %c0_10 = arith.constant 0 : index
    %c0_11 = arith.constant 0 : index
    %c0_12 = arith.constant 0 : index
    %13 = vector.load %arg5[%c0_10, %c0_11, %c0_12] : memref<4x32x1xf32, #tpu.memory_space<vmem>>, vector<1x32x1xf32>
    %14 = vector.shape_cast %13 : vector<1x32x1xf32> to vector<32x1xf32>
    %15 = vector.broadcast %14 : vector<32x1xf32> to vector<32x128xf32>
    %16 = arith.addf %12, %15 : vector<32x128xf32>
    %cst_13 = arith.constant 0.000000e+00 : f32
    %17 = vector.broadcast %cst_13 : f32 to vector<32x128xf32>
    %18 = arith.maximumf %16, %17 : vector<32x128xf32>
    %c1 = arith.constant 1 : index
    %c0_14 = arith.constant 0 : index
    %c0_15 = arith.constant 0 : index
    %19 = vector.load %arg4[%c1, %c0_14, %c0_15] : memref<4x32x32xf32, #tpu.memory_space<vmem>>, vector<1x32x32xf32>
    %20 = vector.shape_cast %19 : vector<1x32x32xf32> to vector<32x32xf32>
    %cst_16 = arith.constant dense<0.000000e+00> : vector<32x128xf32>
    %21 = tpu.matmul %20, %18, %cst_16 {dimension_numbers = #tpu.dot_dimension_numbers<[1], [0], [0], [1], [0, 0, 1, 1], [], []>} : vector<32x32xf32>, vector<32x128xf32>, vector<32x128xf32> -> vector<32x128xf32>
    %c1_17 = arith.constant 1 : index
    %c0_18 = arith.constant 0 : index
    %c0_19 = arith.constant 0 : index
    %22 = vector.load %arg5[%c1_17, %c0_18, %c0_19] : memref<4x32x1xf32, #tpu.memory_space<vmem>>, vector<1x32x1xf32>
    %23 = vector.shape_cast %22 : vector<1x32x1xf32> to vector<32x1xf32>
    %24 = vector.broadcast %23 : vector<32x1xf32> to vector<32x128xf32>
    %25 = arith.addf %21, %24 : vector<32x128xf32>
    %cst_20 = arith.constant 0.000000e+00 : f32
    %26 = vector.broadcast %cst_20 : f32 to vector<32x128xf32>
    %27 = arith.maximumf %25, %26 : vector<32x128xf32>
    %c2 = arith.constant 2 : index
    %c0_21 = arith.constant 0 : index
    %c0_22 = arith.constant 0 : index
    %28 = vector.load %arg4[%c2, %c0_21, %c0_22] : memref<4x32x32xf32, #tpu.memory_space<vmem>>, vector<1x32x32xf32>
    %29 = vector.shape_cast %28 : vector<1x32x32xf32> to vector<32x32xf32>
    %cst_23 = arith.constant dense<0.000000e+00> : vector<32x128xf32>
    %30 = tpu.matmul %29, %27, %cst_23 {dimension_numbers = #tpu.dot_dimension_numbers<[1], [0], [0], [1], [0, 0, 1, 1], [], []>} : vector<32x32xf32>, vector<32x128xf32>, vector<32x128xf32> -> vector<32x128xf32>
    %c2_24 = arith.constant 2 : index
    %c0_25 = arith.constant 0 : index
    %c0_26 = arith.constant 0 : index
    %31 = vector.load %arg5[%c2_24, %c0_25, %c0_26] : memref<4x32x1xf32, #tpu.memory_space<vmem>>, vector<1x32x1xf32>
    %32 = vector.shape_cast %31 : vector<1x32x1xf32> to vector<32x1xf32>
    %33 = vector.broadcast %32 : vector<32x1xf32> to vector<32x128xf32>
    %34 = arith.addf %30, %33 : vector<32x128xf32>
    %cst_27 = arith.constant 0.000000e+00 : f32
    %35 = vector.broadcast %cst_27 : f32 to vector<32x128xf32>
    %36 = arith.maximumf %34, %35 : vector<32x128xf32>
    %c3 = arith.constant 3 : index
    %c0_28 = arith.constant 0 : index
    %c0_29 = arith.constant 0 : index
    %37 = vector.load %arg4[%c3, %c0_28, %c0_29] : memref<4x32x32xf32, #tpu.memory_space<vmem>>, vector<1x32x32xf32>
    %38 = vector.shape_cast %37 : vector<1x32x32xf32> to vector<32x32xf32>
    %cst_30 = arith.constant dense<0.000000e+00> : vector<32x128xf32>
    %39 = tpu.matmul %38, %36, %cst_30 {dimension_numbers = #tpu.dot_dimension_numbers<[1], [0], [0], [1], [0, 0, 1, 1], [], []>} : vector<32x32xf32>, vector<32x128xf32>, vector<32x128xf32> -> vector<32x128xf32>
    %c3_31 = arith.constant 3 : index
    %c0_32 = arith.constant 0 : index
    %c0_33 = arith.constant 0 : index
    %40 = vector.load %arg5[%c3_31, %c0_32, %c0_33] : memref<4x32x1xf32, #tpu.memory_space<vmem>>, vector<1x32x1xf32>
    %41 = vector.shape_cast %40 : vector<1x32x1xf32> to vector<32x1xf32>
    %42 = vector.broadcast %41 : vector<32x1xf32> to vector<32x128xf32>
    %43 = arith.addf %39, %42 : vector<32x128xf32>
    %cst_34 = arith.constant 0.000000e+00 : f32
    %44 = vector.broadcast %cst_34 : f32 to vector<32x128xf32>
    %45 = arith.maximumf %43, %44 : vector<32x128xf32>
    %c0_35 = arith.constant 0 : index
    %c0_36 = arith.constant 0 : index
    %46 = vector.load %arg6[%c0_35, %c0_36] : memref<3x32xf32, #tpu.memory_space<vmem>>, vector<3x32xf32>
    %cst_37 = arith.constant dense<0.000000e+00> : vector<3x128xf32>
    %47 = tpu.matmul %46, %45, %cst_37 {dimension_numbers = #tpu.dot_dimension_numbers<[1], [0], [0], [1], [0, 0, 1, 1], [], []>} : vector<3x32xf32>, vector<32x128xf32>, vector<3x128xf32> -> vector<3x128xf32>
    %c0_38 = arith.constant 0 : index
    %c0_39 = arith.constant 0 : index
    %48 = vector.load %arg7[%c0_38, %c0_39] : memref<3x1xf32, #tpu.memory_space<vmem>>, vector<3x1xf32>
    %49 = vector.broadcast %48 : vector<3x1xf32> to vector<3x128xf32>
    %50 = arith.addf %47, %49 : vector<3x128xf32>
    %c0_40 = arith.constant 0 : index
    %c0_41 = arith.constant 0 : index
    %51 = vector.load %arg8[%c0_40, %c0_41] : memref<32x4xf32, #tpu.memory_space<vmem>>, vector<32x4xf32>
    %cst_42 = arith.constant dense<0.000000e+00> : vector<32x128xf32>
    %52 = tpu.matmul %51, %2, %cst_42 {dimension_numbers = #tpu.dot_dimension_numbers<[1], [0], [0], [1], [0, 0, 1, 1], [], []>} : vector<32x4xf32>, vector<4x128xf32>, vector<32x128xf32> -> vector<32x128xf32>
    %c0_43 = arith.constant 0 : index
    %c0_44 = arith.constant 0 : index
    %53 = vector.load %arg9[%c0_43, %c0_44] : memref<32x1xf32, #tpu.memory_space<vmem>>, vector<32x1xf32>
    %54 = vector.broadcast %53 : vector<32x1xf32> to vector<32x128xf32>
    %55 = arith.addf %52, %54 : vector<32x128xf32>
    %cst_45 = arith.constant 0.000000e+00 : f32
    %56 = vector.broadcast %cst_45 : f32 to vector<32x128xf32>
    %57 = arith.maximumf %55, %56 : vector<32x128xf32>
    %c0_46 = arith.constant 0 : index
    %c0_47 = arith.constant 0 : index
    %c0_48 = arith.constant 0 : index
    %58 = vector.load %arg10[%c0_46, %c0_47, %c0_48] : memref<4x32x32xf32, #tpu.memory_space<vmem>>, vector<1x32x32xf32>
    %59 = vector.shape_cast %58 : vector<1x32x32xf32> to vector<32x32xf32>
    %cst_49 = arith.constant dense<0.000000e+00> : vector<32x128xf32>
    %60 = tpu.matmul %59, %57, %cst_49 {dimension_numbers = #tpu.dot_dimension_numbers<[1], [0], [0], [1], [0, 0, 1, 1], [], []>} : vector<32x32xf32>, vector<32x128xf32>, vector<32x128xf32> -> vector<32x128xf32>
    %c0_50 = arith.constant 0 : index
    %c0_51 = arith.constant 0 : index
    %c0_52 = arith.constant 0 : index
    %61 = vector.load %arg11[%c0_50, %c0_51, %c0_52] : memref<4x32x1xf32, #tpu.memory_space<vmem>>, vector<1x32x1xf32>
    %62 = vector.shape_cast %61 : vector<1x32x1xf32> to vector<32x1xf32>
    %63 = vector.broadcast %62 : vector<32x1xf32> to vector<32x128xf32>
    %64 = arith.addf %60, %63 : vector<32x128xf32>
    %cst_53 = arith.constant 0.000000e+00 : f32
    %65 = vector.broadcast %cst_53 : f32 to vector<32x128xf32>
    %66 = arith.maximumf %64, %65 : vector<32x128xf32>
    %c1_54 = arith.constant 1 : index
    %c0_55 = arith.constant 0 : index
    %c0_56 = arith.constant 0 : index
    %67 = vector.load %arg10[%c1_54, %c0_55, %c0_56] : memref<4x32x32xf32, #tpu.memory_space<vmem>>, vector<1x32x32xf32>
    %68 = vector.shape_cast %67 : vector<1x32x32xf32> to vector<32x32xf32>
    %cst_57 = arith.constant dense<0.000000e+00> : vector<32x128xf32>
    %69 = tpu.matmul %68, %66, %cst_57 {dimension_numbers = #tpu.dot_dimension_numbers<[1], [0], [0], [1], [0, 0, 1, 1], [], []>} : vector<32x32xf32>, vector<32x128xf32>, vector<32x128xf32> -> vector<32x128xf32>
    %c1_58 = arith.constant 1 : index
    %c0_59 = arith.constant 0 : index
    %c0_60 = arith.constant 0 : index
    %70 = vector.load %arg11[%c1_58, %c0_59, %c0_60] : memref<4x32x1xf32, #tpu.memory_space<vmem>>, vector<1x32x1xf32>
    %71 = vector.shape_cast %70 : vector<1x32x1xf32> to vector<32x1xf32>
    %72 = vector.broadcast %71 : vector<32x1xf32> to vector<32x128xf32>
    %73 = arith.addf %69, %72 : vector<32x128xf32>
    %cst_61 = arith.constant 0.000000e+00 : f32
    %74 = vector.broadcast %cst_61 : f32 to vector<32x128xf32>
    %75 = arith.maximumf %73, %74 : vector<32x128xf32>
    %c2_62 = arith.constant 2 : index
    %c0_63 = arith.constant 0 : index
    %c0_64 = arith.constant 0 : index
    %76 = vector.load %arg10[%c2_62, %c0_63, %c0_64] : memref<4x32x32xf32, #tpu.memory_space<vmem>>, vector<1x32x32xf32>
    %77 = vector.shape_cast %76 : vector<1x32x32xf32> to vector<32x32xf32>
    %cst_65 = arith.constant dense<0.000000e+00> : vector<32x128xf32>
    %78 = tpu.matmul %77, %75, %cst_65 {dimension_numbers = #tpu.dot_dimension_numbers<[1], [0], [0], [1], [0, 0, 1, 1], [], []>} : vector<32x32xf32>, vector<32x128xf32>, vector<32x128xf32> -> vector<32x128xf32>
    %c2_66 = arith.constant 2 : index
    %c0_67 = arith.constant 0 : index
    %c0_68 = arith.constant 0 : index
    %79 = vector.load %arg11[%c2_66, %c0_67, %c0_68] : memref<4x32x1xf32, #tpu.memory_space<vmem>>, vector<1x32x1xf32>
    %80 = vector.shape_cast %79 : vector<1x32x1xf32> to vector<32x1xf32>
    %81 = vector.broadcast %80 : vector<32x1xf32> to vector<32x128xf32>
    %82 = arith.addf %78, %81 : vector<32x128xf32>
    %cst_69 = arith.constant 0.000000e+00 : f32
    %83 = vector.broadcast %cst_69 : f32 to vector<32x128xf32>
    %84 = arith.maximumf %82, %83 : vector<32x128xf32>
    %c3_70 = arith.constant 3 : index
    %c0_71 = arith.constant 0 : index
    %c0_72 = arith.constant 0 : index
    %85 = vector.load %arg10[%c3_70, %c0_71, %c0_72] : memref<4x32x32xf32, #tpu.memory_space<vmem>>, vector<1x32x32xf32>
    %86 = vector.shape_cast %85 : vector<1x32x32xf32> to vector<32x32xf32>
    %cst_73 = arith.constant dense<0.000000e+00> : vector<32x128xf32>
    %87 = tpu.matmul %86, %84, %cst_73 {dimension_numbers = #tpu.dot_dimension_numbers<[1], [0], [0], [1], [0, 0, 1, 1], [], []>} : vector<32x32xf32>, vector<32x128xf32>, vector<32x128xf32> -> vector<32x128xf32>
    %c3_74 = arith.constant 3 : index
    %c0_75 = arith.constant 0 : index
    %c0_76 = arith.constant 0 : index
    %88 = vector.load %arg11[%c3_74, %c0_75, %c0_76] : memref<4x32x1xf32, #tpu.memory_space<vmem>>, vector<1x32x1xf32>
    %89 = vector.shape_cast %88 : vector<1x32x1xf32> to vector<32x1xf32>
    %90 = vector.broadcast %89 : vector<32x1xf32> to vector<32x128xf32>
    %91 = arith.addf %87, %90 : vector<32x128xf32>
    %cst_77 = arith.constant 0.000000e+00 : f32
    %92 = vector.broadcast %cst_77 : f32 to vector<32x128xf32>
    %93 = arith.maximumf %91, %92 : vector<32x128xf32>
    %c0_78 = arith.constant 0 : index
    %c0_79 = arith.constant 0 : index
    %94 = vector.load %arg12[%c0_78, %c0_79] : memref<2x32xf32, #tpu.memory_space<vmem>>, vector<2x32xf32>
    %cst_80 = arith.constant dense<0.000000e+00> : vector<2x128xf32>
    %95 = tpu.matmul %94, %93, %cst_80 {dimension_numbers = #tpu.dot_dimension_numbers<[1], [0], [0], [1], [0, 0, 1, 1], [], []>} : vector<2x32xf32>, vector<32x128xf32>, vector<2x128xf32> -> vector<2x128xf32>
    %c0_81 = arith.constant 0 : index
    %c0_82 = arith.constant 0 : index
    %96 = vector.load %arg13[%c0_81, %c0_82] : memref<2x1xf32, #tpu.memory_space<vmem>>, vector<2x1xf32>
    %97 = vector.broadcast %96 : vector<2x1xf32> to vector<2x128xf32>
    %98 = arith.addf %95, %97 : vector<2x128xf32>
    %c0_83 = arith.constant 0 : index
    %c0_84 = arith.constant 0 : index
    %99 = vector.load %arg14[%c0_83, %c0_84] : memref<3x128xf32, #tpu.memory_space<vmem>>, vector<3x128xf32>
    tpu.vector_store %arg14[%c0_83, %c0_84], %50 {strides = array<i32>} : memref<3x128xf32, #tpu.memory_space<vmem>>, vector<3x128xf32>,
    %100 = arith.addf %98, %1 : vector<2x128xf32>
    %c0_85 = arith.constant 0 : index
    %c0_86 = arith.constant 0 : index
    %101 = vector.load %arg15[%c0_85, %c0_86] : memref<2x128xf32, #tpu.memory_space<vmem>>, vector<2x128xf32>
    tpu.vector_store %arg15[%c0_85, %c0_86], %100 {strides = array<i32>} : memref<2x128xf32, #tpu.memory_space<vmem>>, vector<2x128xf32>,
    return
  }
  func.func @transform_0(%arg0: i32) -> (i32, i32) {
    %c0_i32 = arith.constant 0 : i32
    %c0_i32_0 = arith.constant 0 : i32
    return %c0_i32, %arg0 : i32, i32
  }
  func.func @transform_1(%arg0: i32) -> (i32, i32) {
    %c0_i32 = arith.constant 0 : i32
    %c0_i32_0 = arith.constant 0 : i32
    %c0_i32_1 = arith.constant 0 : i32
    return %c0_i32, %c0_i32_0 : i32, i32
  }
  func.func @transform_2(%arg0: i32) -> (i32, i32) {
    %c0_i32 = arith.constant 0 : i32
    %c0_i32_0 = arith.constant 0 : i32
    %c0_i32_1 = arith.constant 0 : i32
    return %c0_i32, %c0_i32_0 : i32, i32
  }
  func.func @transform_3(%arg0: i32) -> (i32, i32, i32) {
    %c0_i32 = arith.constant 0 : i32
    %c0_i32_0 = arith.constant 0 : i32
    %c0_i32_1 = arith.constant 0 : i32
    %c0_i32_2 = arith.constant 0 : i32
    return %c0_i32, %c0_i32_0, %c0_i32_1 : i32, i32, i32
  }
  func.func @transform_4(%arg0: i32) -> (i32, i32, i32) {
    %c0_i32 = arith.constant 0 : i32
    %c0_i32_0 = arith.constant 0 : i32
    %c0_i32_1 = arith.constant 0 : i32
    %c0_i32_2 = arith.constant 0 : i32
    return %c0_i32, %c0_i32_0, %c0_i32_1 : i32, i32, i32
  }
  func.func @transform_5(%arg0: i32) -> (i32, i32) {
    %c0_i32 = arith.constant 0 : i32
    %c0_i32_0 = arith.constant 0 : i32
    %c0_i32_1 = arith.constant 0 : i32
    return %c0_i32, %c0_i32_0 : i32, i32
  }
  func.func @transform_6(%arg0: i32) -> (i32, i32) {
    %c0_i32 = arith.constant 0 : i32
    %c0_i32_0 = arith.constant 0 : i32
    %c0_i32_1 = arith.constant 0 : i32
    return %c0_i32, %c0_i32_0 : i32, i32
  }
  func.func @transform_7(%arg0: i32) -> (i32, i32) {
    %c0_i32 = arith.constant 0 : i32
    %c0_i32_0 = arith.constant 0 : i32
    %c0_i32_1 = arith.constant 0 : i32
    return %c0_i32, %c0_i32_0 : i32, i32
  }
  func.func @transform_8(%arg0: i32) -> (i32, i32) {
    %c0_i32 = arith.constant 0 : i32
    %c0_i32_0 = arith.constant 0 : i32
    %c0_i32_1 = arith.constant 0 : i32
    return %c0_i32, %c0_i32_0 : i32, i32
  }
  func.func @transform_9(%arg0: i32) -> (i32, i32, i32) {
    %c0_i32 = arith.constant 0 : i32
    %c0_i32_0 = arith.constant 0 : i32
    %c0_i32_1 = arith.constant 0 : i32
    %c0_i32_2 = arith.constant 0 : i32
    return %c0_i32, %c0_i32_0, %c0_i32_1 : i32, i32, i32
  }
  func.func @transform_10(%arg0: i32) -> (i32, i32, i32) {
    %c0_i32 = arith.constant 0 : i32
    %c0_i32_0 = arith.constant 0 : i32
    %c0_i32_1 = arith.constant 0 : i32
    %c0_i32_2 = arith.constant 0 : i32
    return %c0_i32, %c0_i32_0, %c0_i32_1 : i32, i32, i32
  }
  func.func @transform_11(%arg0: i32) -> (i32, i32) {
    %c0_i32 = arith.constant 0 : i32
    %c0_i32_0 = arith.constant 0 : i32
    %c0_i32_1 = arith.constant 0 : i32
    return %c0_i32, %c0_i32_0 : i32, i32
  }
  func.func @transform_12(%arg0: i32) -> (i32, i32) {
    %c0_i32 = arith.constant 0 : i32
    %c0_i32_0 = arith.constant 0 : i32
    %c0_i32_1 = arith.constant 0 : i32
    return %c0_i32, %c0_i32_0 : i32, i32
  }
  func.func @transform_13(%arg0: i32) -> (i32, i32) {
    %c0_i32 = arith.constant 0 : i32
    %c0_i32_0 = arith.constant 0 : i32
    return %c0_i32, %arg0 : i32, i32
  }
  func.func @transform_14(%arg0: i32) -> (i32, i32) {
    %c0_i32 = arith.constant 0 : i32
    %c0_i32_0 = arith.constant 0 : i32
    return %c0_i32, %arg0 : i32, i32
  }
}

</mosaic_0001>

<llo_original>
// kernel: tpu_custom_call.1
$region0: #{tpu_custom_call.1}
  #allocation0 [shape = 'u32[]', space=smem, size = 0x4, offset = 0x4, fixed_abs, tag = 'smem constant byte address 0x4 - core index']
  #allocation1 [shape = 'u32[144,128]{1,0:T(1,128)}', space=vmem, size = 0x12000, scoped, tag = 'internal scratch']
  %s0 = inlined_call_operand.vmem [shape: f32[6,128], index: 0, kind: input, shape index: {}]
  %s1 = inlined_call_operand.vmem [shape: f32[32,4], index: 1, kind: input, shape index: {}]
  %s2 = inlined_call_operand.vmem [shape: f32[32,1], index: 2, kind: input, shape index: {}]
  %s3 = inlined_call_operand.vmem [shape: f32[4,32,32], index: 3, kind: input, shape index: {}]
  %s4 = inlined_call_operand.vmem [shape: f32[4,32,1], index: 4, kind: input, shape index: {}]
  %s5 = inlined_call_operand.vmem [shape: f32[3,32], index: 5, kind: input, shape index: {}]
  %s6 = inlined_call_operand.vmem [shape: f32[3,1], index: 6, kind: input, shape index: {}]
  %s7 = inlined_call_operand.vmem [shape: f32[32,4], index: 7, kind: input, shape index: {}]
  %s8 = inlined_call_operand.vmem [shape: f32[32,1], index: 8, kind: input, shape index: {}]
  %s9 = inlined_call_operand.vmem [shape: f32[4,32,32], index: 9, kind: input, shape index: {}]
  %s10 = inlined_call_operand.vmem [shape: f32[4,32,1], index: 10, kind: input, shape index: {}]
  %s11 = inlined_call_operand.vmem [shape: f32[2,32], index: 11, kind: input, shape index: {}]
  %s12 = inlined_call_operand.vmem [shape: f32[2,1], index: 12, kind: input, shape index: {}]
  %s13 = inlined_call_operand.hbm [shape: f32[3,128], index: 13, kind: output, shape index: {0}]
  %s14 = inlined_call_operand.hbm [shape: f32[2,128], index: 14, kind: output, shape index: {1}]
  %15 = xla_tuple %s13, %s14
  %s16 = sld [smem:[#allocation0]]
  $region70: #{tpu_custom_call.1} parent=0
    _
  %s18 = ssub.s32 1, %s16
  %s19 = scalar_select 0, %s18, %s16
  $region1: #{tpu_custom_call.1} parent=0
    #allocation2 [shape = 'u8[2048]{0}', space=vmem, size = 0x800, scoped, tag = 'output window, operand 0, single buffered']
    #allocation3 [shape = 's32[1]{0}', space=sflag, size = 0x4, scoped, tag = 'scoped memory for tpu_custom_call.1']
    #allocation4 [shape = 'u8[1024]{0}', space=vmem, size = 0x400, scoped, tag = 'output window, operand 1, single buffered']
    #allocation5 [shape = 's32[1]{0}', space=sflag, size = 0x4, scoped, tag = 'scoped memory for tpu_custom_call.1']
    %20 = vsyncpa [#allocation3], 0
    %21 = vsyncpa [#allocation5], 0
    // Predicated region
    $region2: #{tpu_custom_call.1} parent=1 // pred_check
      _
    $region3: #{tpu_custom_call.1} parent=1 // pred_check_branch
      %23 = sbr.rel (0) target = $region5
    $region4: #{tpu_custom_call.1} parent=1 // pred_region
      _
    $region5: #{tpu_custom_call.1} parent=1 // pred_fallthru
      _
    // Predicated region
    $region6: #{tpu_custom_call.1} parent=1 // pred_check
      _
    $region7: #{tpu_custom_call.1} parent=1 // pred_check_branch
      %25 = sbr.rel (0) target = $region9
    $region8: #{tpu_custom_call.1} parent=1 // pred_region
      _
    $region9: #{tpu_custom_call.1} parent=1 // pred_fallthru
      _
    // Predicated region
    $region10: #{tpu_custom_call.1} parent=1 // pred_check
      _
    $region11: #{tpu_custom_call.1} parent=1 // pred_check_branch
      %27 = sbr.rel (0) target = $region13
    $region12: #{tpu_custom_call.1} parent=1 // pred_region
      _
    $region13: #{tpu_custom_call.1} parent=1 // pred_fallthru
      _
    // Predicated region
    $region14: #{tpu_custom_call.1} parent=1 // pred_check
      _
    $region15: #{tpu_custom_call.1} parent=1 // pred_check_branch
      %29 = sbr.rel (0) target = $region17
    $region16: #{tpu_custom_call.1} parent=1 // pred_region
      _
    $region17: #{tpu_custom_call.1} parent=1 // pred_fallthru
      _
    // Predicated region
    $region18: #{tpu_custom_call.1} parent=1 // pred_check
      _
    $region19: #{tpu_custom_call.1} parent=1 // pred_check_branch
      %31 = sbr.rel (0) target = $region21
    $region20: #{tpu_custom_call.1} parent=1 // pred_region
      _
    $region21: #{tpu_custom_call.1} parent=1 // pred_fallthru
      _
    // Predicated region
    $region22: #{tpu_custom_call.1} parent=1 // pred_check
      _
    $region23: #{tpu_custom_call.1} parent=1 // pred_check_branch
      %33 = sbr.rel (0) target = $region25
    $region24: #{tpu_custom_call.1} parent=1 // pred_region
      _
    $region25: #{tpu_custom_call.1} parent=1 // pred_fallthru
      _
    // Predicated region
    $region26: #{tpu_custom_call.1} parent=1 // pred_check
      _
    $region27: #{tpu_custom_call.1} parent=1 // pred_check_branch
      %35 = sbr.rel (0) target = $region29
    $region28: #{tpu_custom_call.1} parent=1 // pred_region
      _
    $region29: #{tpu_custom_call.1} parent=1 // pred_fallthru
      _
    // Predicated region
    $region30: #{tpu_custom_call.1} parent=1 // pred_check
      _
    $region31: #{tpu_custom_call.1} parent=1 // pred_check_branch
      %37 = sbr.rel (0) target = $region33
    $region32: #{tpu_custom_call.1} parent=1 // pred_region
      _
    $region33: #{tpu_custom_call.1} parent=1 // pred_fallthru
      _
    // Predicated region
    $region34: #{tpu_custom_call.1} parent=1 // pred_check
      _
    $region35: #{tpu_custom_call.1} parent=1 // pred_check_branch
      %39 = sbr.rel (0) target = $region37
    $region36: #{tpu_custom_call.1} parent=1 // pred_region
      _
    $region37: #{tpu_custom_call.1} parent=1 // pred_fallthru
      _
    // Predicated region
    $region38: #{tpu_custom_call.1} parent=1 // pred_check
      _
    $region39: #{tpu_custom_call.1} parent=1 // pred_check_branch
      %41 = sbr.rel (0) target = $region41
    $region40: #{tpu_custom_call.1} parent=1 // pred_region
      _
    $region41: #{tpu_custom_call.1} parent=1 // pred_fallthru
      _
    // Predicated region
    $region42: #{tpu_custom_call.1} parent=1 // pred_check
      _
    $region43: #{tpu_custom_call.1} parent=1 // pred_check_branch
      %43 = sbr.rel (0) target = $region45
    $region44: #{tpu_custom_call.1} parent=1 // pred_region
      _
    $region45: #{tpu_custom_call.1} parent=1 // pred_fallthru
      _
    // Predicated region
    $region46: #{tpu_custom_call.1} parent=1 // pred_check
      _
    $region47: #{tpu_custom_call.1} parent=1 // pred_check_branch
      %45 = sbr.rel (0) target = $region49
    $region48: #{tpu_custom_call.1} parent=1 // pred_region
      _
    $region49: #{tpu_custom_call.1} parent=1 // pred_fallthru
      _
    // Predicated region
    $region50: #{tpu_custom_call.1} parent=1 // pred_check
      _
    $region51: #{tpu_custom_call.1} parent=1 // pred_check_branch
      %47 = sbr.rel (0) target = $region53
    $region52: #{tpu_custom_call.1} parent=1 // pred_region
      _
    $region53: #{tpu_custom_call.1} parent=1 // pred_fallthru
      _
    %v48 = vld [vmem:[%s0] sm:$0x3f]
    %v49 = vld [vmem:[%s1] sm:$0xff]
    %v50 = vld [vmem:[%s1 + $0x8] sm:$0xff]
    %v51 = vld [vmem:[%s1 + $0x10] sm:$0xff]
    %v52 = vld [vmem:[%s1 + $0x18] sm:$0xff]
    %v53 = vld [vmem:[%s2] sm:$0xff]
    %v54 = vld [vmem:[%s2 + $0x8] sm:$0xff]
    %v55 = vld [vmem:[%s2 + $0x10] sm:$0xff]
    %v56 = vld [vmem:[%s2 + $0x18] sm:$0xff]
    %58 = vset.pattern.permute.xlu0 0
    %59 = vperm.xlu0 %58, %v53
    %v60 = vpop.permute.xlu0 %59
    %63 = vset.pattern.permute.xlu0 0
    %64 = vperm.xlu0 %63, %v54
    %v65 = vpop.permute.xlu0 %64
    %68 = vset.pattern.permute.xlu0 0
    %69 = vperm.xlu0 %68, %v55
    %v70 = vpop.permute.xlu0 %69
    %73 = vset.pattern.permute.xlu0 0
    %74 = vperm.xlu0 %73, %v56
    %v75 = vpop.permute.xlu0 %74
    %v78 = vrot.slane %v48, 2
    %vm79 = vcmask 31744
    %v81 = vsel %vm79, %v49, 0
    %v84 = vsel %vm79, %v50, 0
    %v87 = vsel %vm79, %v51, 0
    %v90 = vsel %vm79, %v52, 0
    %vm92 = vcmask 1043456
    %v93 = vsel %vm92, %v78, 0
    %95 = vmatprep.subr.mxu0 0.0
    %96 = vmatpush1.msra.mxu0 %v93
    %97 = vmatprep.subr.mxu0 0.0
    %98 = vmatpush1.msra.mxu0 0.0
    %99 = vmatprep.subr.mxu0 0.0
    %100 = vmatpush1.msra.mxu0 0.0
    %101 = vmatprep.subr.mxu0 0.0
    %102 = vmatpush1.msra.mxu0 0.0
    %103 = vmatprep.subr.mxu0 0.0
    %104 = vmatpush1.msra.mxu0 0.0
    %105 = vmatprep.subr.mxu0 0.0
    %106 = vmatpush1.msra.mxu0 0.0
    %107 = vmatprep.subr.mxu0 0.0
    %108 = vmatpush1.msra.mxu0 0.0
    %109 = vmatprep.subr.mxu0 0.0
    %110 = vmatpush1.msra.mxu0 0.0
    %111 = vmatprep.subr.mxu0 0.0
    %112 = vmatpush1.msra.mxu0 0.0
    %113 = vmatprep.subr.mxu0 0.0
    %114 = vmatpush1.msra.mxu0 0.0
    %115 = vmatprep.subr.mxu0 0.0
    %116 = vmatpush1.msra.mxu0 0.0
    %117 = vmatprep.subr.mxu0 0.0
    %118 = vmatpush1.msra.mxu0 0.0
    %119 = vmatprep.subr.mxu0 0.0
    %120 = vmatpush1.msra.mxu0 0.0
    %121 = vmatprep.subr.mxu0 0.0
    %122 = vmatpush1.msra.mxu0 0.0
    %123 = vmatprep.subr.mxu0 0.0
    %124 = vmatpush1.msra.mxu0 0.0
    %125 = vmatprep.subr.mxu0 0.0
    %126 = vmatpush1.msra.mxu0 0.0
    %127 = vmatprep.subr.mxu0 0.0
    %128 = vmatpush1.msra.mxu0 0.0
    %129 = vmatprep.subr.mxu0 0.0
    %130 = vmatpush1.msra.mxu0 0.0
    %131 = vmatprep.subr.mxu0 0.0
    %132 = vmatpush1.msra.mxu0 0.0
    %133 = vmatprep.subr.mxu0 0.0
    %134 = vmatpush1.msra.mxu0 0.0
    %135 = vmatprep.subr.mxu0 0.0
    %136 = vmatpush1.msra.mxu0 0.0
    %137 = vmatprep.subr.mxu0 0.0
    %138 = vmatpush1.msra.mxu0 0.0
    %139 = vmatprep.subr.mxu0 0.0
    %140 = vmatpush1.msra.mxu0 0.0
    %141 = vmatprep.subr.mxu0 0.0
    %142 = vmatpush1.msra.mxu0 0.0
    %143 = vmatprep.subr.mxu0 0.0
    %144 = vmatpush1.msra.mxu0 0.0
    %145 = vmatprep.subr.mxu0 0.0
    %146 = vmatpush1.msra.mxu0 0.0
    %147 = vmatprep.subr.mxu0 0.0
    %148 = vmatpush1.msra.mxu0 0.0
    %149 = vmatprep.subr.mxu0 0.0
    %150 = vmatpush1.msra.mxu0 0.0
    %151 = vmatprep.subr.mxu0 0.0
    %152 = vmatpush1.msra.mxu0 0.0
    %153 = vmatprep.subr.mxu0 0.0
    %154 = vmatpush1.msra.mxu0 0.0
    %155 = vmatprep.subr.mxu0 0.0
    %156 = vmatpush1.msra.mxu0 0.0
    %157 = vmatprep.subr.mxu0 0.0
    %158 = vmatpush1.msra.mxu0 0.0
    %159 = vmatprep.mubr.f32.mxu0 0.0
    %160 = vmatmul.mubr.f32.gmra.mrb[0].mxu0 %v81
    %v161 = vpop.f32.mrb[0].mxu0
    %v162 = vadd.f32 %v60, %v161
    %v163 = vpop.f32.mrb[0].mxu0
    %164 = vmatprep.mubr.f32.mxu0 0.0
    %165 = vmatmul.mubr.f32.gmra.mrb[0].mxu0 %v84
    %v166 = vpop.f32.mrb[0].mxu0
    %v167 = vadd.f32 %v65, %v166
    %v168 = vpop.f32.mrb[0].mxu0
    %169 = vmatprep.mubr.f32.mxu0 0.0
    %170 = vmatmul.mubr.f32.gmra.mrb[0].mxu0 %v87
    %v171 = vpop.f32.mrb[0].mxu0
    %v172 = vadd.f32 %v70, %v171
    %v173 = vpop.f32.mrb[0].mxu0
    %174 = vmatprep.mubr.f32.mxu0 0.0
    %175 = vmatmul.mubr.f32.gmra.mrb[0].mxu0 %v90
    %v176 = vpop.f32.mrb[0].mxu0
    %v177 = vadd.f32 %v75, %v176
    %v178 = vpop.f32.mrb[0].mxu0
    %179 = vdwg.mxu0
    %v180 = vmax.f32 %v162, 0.0
    %v181 = vmax.f32 %v167, 0.0
    %v182 = vmax.f32 %v172, 0.0
    %v183 = vmax.f32 %v177, 0.0
    %v184 = vld [vmem:[%s3] sm:$0xff]
    %v185 = vld [vmem:[%s3 + $0x8] sm:$0xff]
    %v186 = vld [vmem:[%s3 + $0x10] sm:$0xff]
    %v187 = vld [vmem:[%s3 + $0x18] sm:$0xff]
    %v188 = vld [vmem:[%s4] sm:$0xff]
    %v189 = vld [vmem:[%s4 + $0x8] sm:$0xff]
    %v190 = vld [vmem:[%s4 + $0x10] sm:$0xff]
    %v191 = vld [vmem:[%s4 + $0x18] sm:$0xff]
    %193 = vset.pattern.permute.xlu0 0
    %194 = vperm.xlu0 %193, %v188
    %v195 = vpop.permute.xlu0 %194
    %198 = vset.pattern.permute.xlu0 0
    %199 = vperm.xlu0 %198, %v189
    %v200 = vpop.permute.xlu0 %199
    %203 = vset.pattern.permute.xlu0 0
    %204 = vperm.xlu0 %203, %v190
    %v205 = vpop.permute.xlu0 %204
    %208 = vset.pattern.permute.xlu0 0
    %209 = vperm.xlu0 %208, %v191
    %v210 = vpop.permute.xlu0 %209
    %vm212 = vcmask 261120
    %v214 = vsel %vm212, %v184, 0
    %v217 = vsel %vm212, %v185, 0
    %v220 = vsel %vm212, %v186, 0
    %v223 = vsel %vm212, %v187, 0
    %225 = vmatprep.subr.mxu0 0.0
    %226 = vmatpush1.msra.mxu0 %v180
    %227 = vmatprep.subr.mxu0 0.0
    %228 = vmatpush1.msra.mxu0 %v181
    %229 = vmatprep.subr.mxu0 0.0
    %230 = vmatpush1.msra.mxu0 %v182
    %231 = vmatprep.subr.mxu0 0.0
    %232 = vmatpush1.msra.mxu0 %v183
    %233 = vmatprep.subr.mxu0 0.0
    %234 = vmatpush1.msra.mxu0 0.0
    %235 = vmatprep.subr.mxu0 0.0
    %236 = vmatpush1.msra.mxu0 0.0
    %237 = vmatprep.subr.mxu0 0.0
    %238 = vmatpush1.msra.mxu0 0.0
    %239 = vmatprep.subr.mxu0 0.0
    %240 = vmatpush1.msra.mxu0 0.0
    %241 = vmatprep.subr.mxu0 0.0
    %242 = vmatpush1.msra.mxu0 0.0
    %243 = vmatprep.subr.mxu0 0.0
    %244 = vmatpush1.msra.mxu0 0.0
    %245 = vmatprep.subr.mxu0 0.0
    %246 = vmatpush1.msra.mxu0 0.0
    %247 = vmatprep.subr.mxu0 0.0
    %248 = vmatpush1.msra.mxu0 0.0
    %249 = vmatprep.subr.mxu0 0.0
    %250 = vmatpush1.msra.mxu0 0.0
    %251 = vmatprep.subr.mxu0 0.0
    %252 = vmatpush1.msra.mxu0 0.0
    %253 = vmatprep.subr.mxu0 0.0
    %254 = vmatpush1.msra.mxu0 0.0
    %255 = vmatprep.subr.mxu0 0.0
    %256 = vmatpush1.msra.mxu0 0.0
    %257 = vmatprep.subr.mxu0 0.0
    %258 = vmatpush1.msra.mxu0 0.0
    %259 = vmatprep.subr.mxu0 0.0
    %260 = vmatpush1.msra.mxu0 0.0
    %261 = vmatprep.subr.mxu0 0.0
    %262 = vmatpush1.msra.mxu0 0.0
    %263 = vmatprep.subr.mxu0 0.0
    %264 = vmatpush1.msra.mxu0 0.0
    %265 = vmatprep.subr.mxu0 0.0
    %266 = vmatpush1.msra.mxu0 0.0
    %267 = vmatprep.subr.mxu0 0.0
    %268 = vmatpush1.msra.mxu0 0.0
    %269 = vmatprep.subr.mxu0 0.0
    %270 = vmatpush1.msra.mxu0 0.0
    %271 = vmatprep.subr.mxu0 0.0
    %272 = vmatpush1.msra.mxu0 0.0
    %273 = vmatprep.subr.mxu0 0.0
    %274 = vmatpush1.msra.mxu0 0.0
    %275 = vmatprep.subr.mxu0 0.0
    %276 = vmatpush1.msra.mxu0 0.0
    %277 = vmatprep.subr.mxu0 0.0
    %278 = vmatpush1.msra.mxu0 0.0
    %279 = vmatprep.subr.mxu0 0.0
    %280 = vmatpush1.msra.mxu0 0.0
    %281 = vmatprep.subr.mxu0 0.0
    %282 = vmatpush1.msra.mxu0 0.0
    %283 = vmatprep.subr.mxu0 0.0
    %284 = vmatpush1.msra.mxu0 0.0
    %285 = vmatprep.subr.mxu0 0.0
    %286 = vmatpush1.msra.mxu0 0.0
    %287 = vmatprep.subr.mxu0 0.0
    %288 = vmatpush1.msra.mxu0 0.0
    %289 = vmatprep.mubr.f32.mxu0 0.0
    %290 = vmatmul.mubr.f32.gmra.mrb[0].mxu0 %v214
    %v291 = vpop.f32.mrb[0].mxu0
    %v292 = vadd.f32 %v195, %v291
    %v293 = vpop.f32.mrb[0].mxu0
    %294 = vmatprep.mubr.f32.mxu0 0.0
    %295 = vmatmul.mubr.f32.gmra.mrb[0].mxu0 %v217
    %v296 = vpop.f32.mrb[0].mxu0
    %v297 = vadd.f32 %v200, %v296
    %v298 = vpop.f32.mrb[0].mxu0
    %299 = vmatprep.mubr.f32.mxu0 0.0
    %300 = vmatmul.mubr.f32.gmra.mrb[0].mxu0 %v220
    %v301 = vpop.f32.mrb[0].mxu0
    %v302 = vadd.f32 %v205, %v301
    %v303 = vpop.f32.mrb[0].mxu0
    %304 = vmatprep.mubr.f32.mxu0 0.0
    %305 = vmatmul.mubr.f32.gmra.mrb[0].mxu0 %v223
    %v306 = vpop.f32.mrb[0].mxu0
    %v307 = vadd.f32 %v210, %v306
    %v308 = vpop.f32.mrb[0].mxu0
    %309 = vdwg.mxu0
    %v310 = vmax.f32 %v292, 0.0
    %v311 = vmax.f32 %v297, 0.0
    %v312 = vmax.f32 %v302, 0.0
    %v313 = vmax.f32 %v307, 0.0
    %s314 = scalar_lea.vmem %s3, 32
    %v315 = vld [vmem:[%s314] sm:$0xff]
    %v316 = vld [vmem:[%s314 + $0x8] sm:$0xff]
    %v317 = vld [vmem:[%s314 + $0x10] sm:$0xff]
    %v318 = vld [vmem:[%s314 + $0x18] sm:$0xff]
    %s319 = scalar_lea.vmem %s4, 32
    %v320 = vld [vmem:[%s319] sm:$0xff]
    %v321 = vld [vmem:[%s319 + $0x8] sm:$0xff]
    %v322 = vld [vmem:[%s319 + $0x10] sm:$0xff]
    %v323 = vld [vmem:[%s319 + $0x18] sm:$0xff]
    %325 = vset.pattern.permute.xlu0 0
    %326 = vperm.xlu0 %325, %v320
    %v327 = vpop.permute.xlu0 %326
    %330 = vset.pattern.permute.xlu0 0
    %331 = vperm.xlu0 %330, %v321
    %v332 = vpop.permute.xlu0 %331
    %335 = vset.pattern.permute.xlu0 0
    %336 = vperm.xlu0 %335, %v322
    %v337 = vpop.permute.xlu0 %336
    %340 = vset.pattern.permute.xlu0 0
    %341 = vperm.xlu0 %340, %v323
    %v342 = vpop.permute.xlu0 %341
    %v345 = vsel %vm212, %v315, 0
    %v348 = vsel %vm212, %v316, 0
    %v351 = vsel %vm212, %v317, 0
    %v354 = vsel %vm212, %v318, 0
    %356 = vmatprep.subr.mxu0 0.0
    %357 = vmatpush1.msra.mxu0 %v310
    %358 = vmatprep.subr.mxu0 0.0
    %359 = vmatpush1.msra.mxu0 %v311
    %360 = vmatprep.subr.mxu0 0.0
    %361 = vmatpush1.msra.mxu0 %v312
    %362 = vmatprep.subr.mxu0 0.0
    %363 = vmatpush1.msra.mxu0 %v313
    %364 = vmatprep.subr.mxu0 0.0
    %365 = vmatpush1.msra.mxu0 0.0
    %366 = vmatprep.subr.mxu0 0.0
    %367 = vmatpush1.msra.mxu0 0.0
    %368 = vmatprep.subr.mxu0 0.0
    %369 = vmatpush1.msra.mxu0 0.0
    %370 = vmatprep.subr.mxu0 0.0
    %371 = vmatpush1.msra.mxu0 0.0
    %372 = vmatprep.subr.mxu0 0.0
    %373 = vmatpush1.msra.mxu0 0.0
    %374 = vmatprep.subr.mxu0 0.0
    %375 = vmatpush1.msra.mxu0 0.0
    %376 = vmatprep.subr.mxu0 0.0
    %377 = vmatpush1.msra.mxu0 0.0
    %378 = vmatprep.subr.mxu0 0.0
    %379 = vmatpush1.msra.mxu0 0.0
    %380 = vmatprep.subr.mxu0 0.0
    %381 = vmatpush1.msra.mxu0 0.0
    %382 = vmatprep.subr.mxu0 0.0
    %383 = vmatpush1.msra.mxu0 0.0
    %384 = vmatprep.subr.mxu0 0.0
    %385 = vmatpush1.msra.mxu0 0.0
    %386 = vmatprep.subr.mxu0 0.0
    %387 = vmatpush1.msra.mxu0 0.0
    %388 = vmatprep.subr.mxu0 0.0
    %389 = vmatpush1.msra.mxu0 0.0
    %390 = vmatprep.subr.mxu0 0.0
    %391 = vmatpush1.msra.mxu0 0.0
    %392 = vmatprep.subr.mxu0 0.0
    %393 = vmatpush1.msra.mxu0 0.0
    %394 = vmatprep.subr.mxu0 0.0
    %395 = vmatpush1.msra.mxu0 0.0
    %396 = vmatprep.subr.mxu0 0.0
    %397 = vmatpush1.msra.mxu0 0.0
    %398 = vmatprep.subr.mxu0 0.0
    %399 = vmatpush1.msra.mxu0 0.0
    %400 = vmatprep.subr.mxu0 0.0
    %401 = vmatpush1.msra.mxu0 0.0
    %402 = vmatprep.subr.mxu0 0.0
    %403 = vmatpush1.msra.mxu0 0.0
    %404 = vmatprep.subr.mxu0 0.0
    %405 = vmatpush1.msra.mxu0 0.0
    %406 = vmatprep.subr.mxu0 0.0
    %407 = vmatpush1.msra.mxu0 0.0
    %408 = vmatprep.subr.mxu0 0.0
    %409 = vmatpush1.msra.mxu0 0.0
    %410 = vmatprep.subr.mxu0 0.0
    %411 = vmatpush1.msra.mxu0 0.0
    %412 = vmatprep.subr.mxu0 0.0
    %413 = vmatpush1.msra.mxu0 0.0
    %414 = vmatprep.subr.mxu0 0.0
    %415 = vmatpush1.msra.mxu0 0.0
    %416 = vmatprep.subr.mxu0 0.0
    %417 = vmatpush1.msra.mxu0 0.0
    %418 = vmatprep.subr.mxu0 0.0
    %419 = vmatpush1.msra.mxu0 0.0
    %420 = vmatprep.mubr.f32.mxu0 0.0
    %421 = vmatmul.mubr.f32.gmra.mrb[0].mxu0 %v345
    %v422 = vpop.f32.mrb[0].mxu0
    %v423 = vadd.f32 %v327, %v422
    %v424 = vpop.f32.mrb[0].mxu0
    %425 = vmatprep.mubr.f32.mxu0 0.0
    %426 = vmatmul.mubr.f32.gmra.mrb[0].mxu0 %v348
    %v427 = vpop.f32.mrb[0].mxu0
    %v428 = vadd.f32 %v332, %v427
    %v429 = vpop.f32.mrb[0].mxu0
    %430 = vmatprep.mubr.f32.mxu0 0.0
    %431 = vmatmul.mubr.f32.gmra.mrb[0].mxu0 %v351
    %v432 = vpop.f32.mrb[0].mxu0
    %v433 = vadd.f32 %v337, %v432
    %v434 = vpop.f32.mrb[0].mxu0
    %435 = vmatprep.mubr.f32.mxu0 0.0
    %436 = vmatmul.mubr.f32.gmra.mrb[0].mxu0 %v354
    %v437 = vpop.f32.mrb[0].mxu0
    %v438 = vadd.f32 %v342, %v437
    %v439 = vpop.f32.mrb[0].mxu0
    %440 = vdwg.mxu0
    %v441 = vmax.f32 %v423, 0.0
    %v442 = vmax.f32 %v428, 0.0
    %v443 = vmax.f32 %v433, 0.0
    %v444 = vmax.f32 %v438, 0.0
    %s445 = scalar_lea.vmem %s3, 64
    %v446 = vld [vmem:[%s445] sm:$0xff]
    %v447 = vld [vmem:[%s445 + $0x8] sm:$0xff]
    %v448 = vld [vmem:[%s445 + $0x10] sm:$0xff]
    %v449 = vld [vmem:[%s445 + $0x18] sm:$0xff]
    %s450 = scalar_lea.vmem %s4, 64
    %v451 = vld [vmem:[%s450] sm:$0xff]
    %v452 = vld [vmem:[%s450 + $0x8] sm:$0xff]
    %v453 = vld [vmem:[%s450 + $0x10] sm:$0xff]
    %v454 = vld [vmem:[%s450 + $0x18] sm:$0xff]
    %456 = vset.pattern.permute.xlu0 0
    %457 = vperm.xlu0 %456, %v451
    %v458 = vpop.permute.xlu0 %457
    %461 = vset.pattern.permute.xlu0 0
    %462 = vperm.xlu0 %461, %v452
    %v463 = vpop.permute.xlu0 %462
    %466 = vset.pattern.permute.xlu0 0
    %467 = vperm.xlu0 %466, %v453
    %v468 = vpop.permute.xlu0 %467
    %471 = vset.pattern.permute.xlu0 0
    %472 = vperm.xlu0 %471, %v454
    %v473 = vpop.permute.xlu0 %472
    %v476 = vsel %vm212, %v446, 0
    %v479 = vsel %vm212, %v447, 0
    %v482 = vsel %vm212, %v448, 0
    %v485 = vsel %vm212, %v449, 0
    %487 = vmatprep.subr.mxu0 0.0
    %488 = vmatpush1.msra.mxu0 %v441
    %489 = vmatprep.subr.mxu0 0.0
    %490 = vmatpush1.msra.mxu0 %v442
    %491 = vmatprep.subr.mxu0 0.0
    %492 = vmatpush1.msra.mxu0 %v443
    %493 = vmatprep.subr.mxu0 0.0
    %494 = vmatpush1.msra.mxu0 %v444
    %495 = vmatprep.subr.mxu0 0.0
    %496 = vmatpush1.msra.mxu0 0.0
    %497 = vmatprep.subr.mxu0 0.0
    %498 = vmatpush1.msra.mxu0 0.0
    %499 = vmatprep.subr.mxu0 0.0
    %500 = vmatpush1.msra.mxu0 0.0
    %501 = vmatprep.subr.mxu0 0.0
    %502 = vmatpush1.msra.mxu0 0.0
    %503 = vmatprep.subr.mxu0 0.0
    %504 = vmatpush1.msra.mxu0 0.0
    %505 = vmatprep.subr.mxu0 0.0
    %506 = vmatpush1.msra.mxu0 0.0
    %507 = vmatprep.subr.mxu0 0.0
    %508 = vmatpush1.msra.mxu0 0.0
    %509 = vmatprep.subr.mxu0 0.0
    %510 = vmatpush1.msra.mxu0 0.0
    %511 = vmatprep.subr.mxu0 0.0
    %512 = vmatpush1.msra.mxu0 0.0
    %513 = vmatprep.subr.mxu0 0.0
    %514 = vmatpush1.msra.mxu0 0.0
    %515 = vmatprep.subr.mxu0 0.0
    %516 = vmatpush1.msra.mxu0 0.0
    %517 = vmatprep.subr.mxu0 0.0
    %518 = vmatpush1.msra.mxu0 0.0
    %519 = vmatprep.subr.mxu0 0.0
    %520 = vmatpush1.msra.mxu0 0.0
    %521 = vmatprep.subr.mxu0 0.0
    %522 = vmatpush1.msra.mxu0 0.0
    %523 = vmatprep.subr.mxu0 0.0
    %524 = vmatpush1.msra.mxu0 0.0
    %525 = vmatprep.subr.mxu0 0.0
    %526 = vmatpush1.msra.mxu0 0.0
    %527 = vmatprep.subr.mxu0 0.0
    %528 = vmatpush1.msra.mxu0 0.0
    %529 = vmatprep.subr.mxu0 0.0
    %530 = vmatpush1.msra.mxu0 0.0
    %531 = vmatprep.subr.mxu0 0.0
    %532 = vmatpush1.msra.mxu0 0.0
    %533 = vmatprep.subr.mxu0 0.0
    %534 = vmatpush1.msra.mxu0 0.0
    %535 = vmatprep.subr.mxu0 0.0
    %536 = vmatpush1.msra.mxu0 0.0
    %537 = vmatprep.subr.mxu0 0.0
    %538 = vmatpush1.msra.mxu0 0.0
    %539 = vmatprep.subr.mxu0 0.0
    %540 = vmatpush1.msra.mxu0 0.0
    %541 = vmatprep.subr.mxu0 0.0
    %542 = vmatpush1.msra.mxu0 0.0
    %543 = vmatprep.subr.mxu0 0.0
    %544 = vmatpush1.msra.mxu0 0.0
    %545 = vmatprep.subr.mxu0 0.0
    %546 = vmatpush1.msra.mxu0 0.0
    %547 = vmatprep.subr.mxu0 0.0
    %548 = vmatpush1.msra.mxu0 0.0
    %549 = vmatprep.subr.mxu0 0.0
    %550 = vmatpush1.msra.mxu0 0.0
    %551 = vmatprep.mubr.f32.mxu0 0.0
    %552 = vmatmul.mubr.f32.gmra.mrb[0].mxu0 %v476
    %v553 = vpop.f32.mrb[0].mxu0
    %v554 = vadd.f32 %v458, %v553
    %v555 = vpop.f32.mrb[0].mxu0
    %556 = vmatprep.mubr.f32.mxu0 0.0
    %557 = vmatmul.mubr.f32.gmra.mrb[0].mxu0 %v479
    %v558 = vpop.f32.mrb[0].mxu0
    %v559 = vadd.f32 %v463, %v558
    %v560 = vpop.f32.mrb[0].mxu0
    %561 = vmatprep.mubr.f32.mxu0 0.0
    %562 = vmatmul.mubr.f32.gmra.mrb[0].mxu0 %v482
    %v563 = vpop.f32.mrb[0].mxu0
    %v564 = vadd.f32 %v468, %v563
    %v565 = vpop.f32.mrb[0].mxu0
    %566 = vmatprep.mubr.f32.mxu0 0.0
    %567 = vmatmul.mubr.f32.gmra.mrb[0].mxu0 %v485
    %v568 = vpop.f32.mrb[0].mxu0
    %v569 = vadd.f32 %v473, %v568
    %v570 = vpop.f32.mrb[0].mxu0
    %571 = vdwg.mxu0
    %v572 = vmax.f32 %v554, 0.0
    %v573 = vmax.f32 %v559, 0.0
    %v574 = vmax.f32 %v564, 0.0
    %v575 = vmax.f32 %v569, 0.0
    %s576 = scalar_lea.vmem %s3, 96
    %v577 = vld [vmem:[%s576] sm:$0xff]
    %v578 = vld [vmem:[%s576 + $0x8] sm:$0xff]
    %v579 = vld [vmem:[%s576 + $0x10] sm:$0xff]
    %v580 = vld [vmem:[%s576 + $0x18] sm:$0xff]
    %s581 = scalar_lea.vmem %s4, 96
    %v582 = vld [vmem:[%s581] sm:$0xff]
    %v583 = vld [vmem:[%s581 + $0x8] sm:$0xff]
    %v584 = vld [vmem:[%s581 + $0x10] sm:$0xff]
    %v585 = vld [vmem:[%s581 + $0x18] sm:$0xff]
    %587 = vset.pattern.permute.xlu0 0
    %588 = vperm.xlu0 %587, %v582
    %v589 = vpop.permute.xlu0 %588
    %592 = vset.pattern.permute.xlu0 0
    %593 = vperm.xlu0 %592, %v583
    %v594 = vpop.permute.xlu0 %593
    %597 = vset.pattern.permute.xlu0 0
    %598 = vperm.xlu0 %597, %v584
    %v599 = vpop.permute.xlu0 %598
    %602 = vset.pattern.permute.xlu0 0
    %603 = vperm.xlu0 %602, %v585
    %v604 = vpop.permute.xlu0 %603
    %v607 = vsel %vm212, %v577, 0
    %v610 = vsel %vm212, %v578, 0
    %v613 = vsel %vm212, %v579, 0
    %v616 = vsel %vm212, %v580, 0
    %618 = vmatprep.subr.mxu0 0.0
    %619 = vmatpush1.msra.mxu0 %v572
    %620 = vmatprep.subr.mxu0 0.0
    %621 = vmatpush1.msra.mxu0 %v573
    %622 = vmatprep.subr.mxu0 0.0
    %623 = vmatpush1.msra.mxu0 %v574
    %624 = vmatprep.subr.mxu0 0.0
    %625 = vmatpush1.msra.mxu0 %v575
    %626 = vmatprep.subr.mxu0 0.0
    %627 = vmatpush1.msra.mxu0 0.0
    %628 = vmatprep.subr.mxu0 0.0
    %629 = vmatpush1.msra.mxu0 0.0
    %630 = vmatprep.subr.mxu0 0.0
    %631 = vmatpush1.msra.mxu0 0.0
    %632 = vmatprep.subr.mxu0 0.0
    %633 = vmatpush1.msra.mxu0 0.0
    %634 = vmatprep.subr.mxu0 0.0
    %635 = vmatpush1.msra.mxu0 0.0
    %636 = vmatprep.subr.mxu0 0.0
    %637 = vmatpush1.msra.mxu0 0.0
    %638 = vmatprep.subr.mxu0 0.0
    %639 = vmatpush1.msra.mxu0 0.0
    %640 = vmatprep.subr.mxu0 0.0
    %641 = vmatpush1.msra.mxu0 0.0
    %642 = vmatprep.subr.mxu0 0.0
    %643 = vmatpush1.msra.mxu0 0.0
    %644 = vmatprep.subr.mxu0 0.0
    %645 = vmatpush1.msra.mxu0 0.0
    %646 = vmatprep.subr.mxu0 0.0
    %647 = vmatpush1.msra.mxu0 0.0
    %648 = vmatprep.subr.mxu0 0.0
    %649 = vmatpush1.msra.mxu0 0.0
    %650 = vmatprep.subr.mxu0 0.0
    %651 = vmatpush1.msra.mxu0 0.0
    %652 = vmatprep.subr.mxu0 0.0
    %653 = vmatpush1.msra.mxu0 0.0
    %654 = vmatprep.subr.mxu0 0.0
    %655 = vmatpush1.msra.mxu0 0.0
    %656 = vmatprep.subr.mxu0 0.0
    %657 = vmatpush1.msra.mxu0 0.0
    %658 = vmatprep.subr.mxu0 0.0
    %659 = vmatpush1.msra.mxu0 0.0
    %660 = vmatprep.subr.mxu0 0.0
    %661 = vmatpush1.msra.mxu0 0.0
    %662 = vmatprep.subr.mxu0 0.0
    %663 = vmatpush1.msra.mxu0 0.0
    %664 = vmatprep.subr.mxu0 0.0
    %665 = vmatpush1.msra.mxu0 0.0
    %666 = vmatprep.subr.mxu0 0.0
    %667 = vmatpush1.msra.mxu0 0.0
    %668 = vmatprep.subr.mxu0 0.0
    %669 = vmatpush1.msra.mxu0 0.0
    %670 = vmatprep.subr.mxu0 0.0
    %671 = vmatpush1.msra.mxu0 0.0
    %672 = vmatprep.subr.mxu0 0.0
    %673 = vmatpush1.msra.mxu0 0.0
    %674 = vmatprep.subr.mxu0 0.0
    %675 = vmatpush1.msra.mxu0 0.0
    %676 = vmatprep.subr.mxu0 0.0
    %677 = vmatpush1.msra.mxu0 0.0
    %678 = vmatprep.subr.mxu0 0.0
    %679 = vmatpush1.msra.mxu0 0.0
    %680 = vmatprep.subr.mxu0 0.0
    %681 = vmatpush1.msra.mxu0 0.0
    %682 = vmatprep.mubr.f32.mxu0 0.0
    %683 = vmatmul.mubr.f32.gmra.mrb[0].mxu0 %v607
    %v684 = vpop.f32.mrb[0].mxu0
    %v685 = vadd.f32 %v589, %v684
    %v686 = vpop.f32.mrb[0].mxu0
    %687 = vmatprep.mubr.f32.mxu0 0.0
    %688 = vmatmul.mubr.f32.gmra.mrb[0].mxu0 %v610
    %v689 = vpop.f32.mrb[0].mxu0
    %v690 = vadd.f32 %v594, %v689
    %v691 = vpop.f32.mrb[0].mxu0
    %692 = vmatprep.mubr.f32.mxu0 0.0
    %693 = vmatmul.mubr.f32.gmra.mrb[0].mxu0 %v613
    %v694 = vpop.f32.mrb[0].mxu0
    %v695 = vadd.f32 %v599, %v694
    %v696 = vpop.f32.mrb[0].mxu0
    %697 = vmatprep.mubr.f32.mxu0 0.0
    %698 = vmatmul.mubr.f32.gmra.mrb[0].mxu0 %v616
    %v699 = vpop.f32.mrb[0].mxu0
    %v700 = vadd.f32 %v604, %v699
    %v701 = vpop.f32.mrb[0].mxu0
    %702 = vdwg.mxu0
    %v703 = vmax.f32 %v685, 0.0
    %v704 = vmax.f32 %v690, 0.0
    %v705 = vmax.f32 %v695, 0.0
    %v706 = vmax.f32 %v700, 0.0
    %v707 = vld [vmem:[%s5] sm:$0x7]
    %v708 = vld [vmem:[%s6] sm:$0x7]
    %710 = vset.pattern.permute.xlu0 0
    %711 = vperm.xlu0 %710, %v708
    %v712 = vpop.permute.xlu0 %711
    %v715 = vsel %vm212, %v707, 0
    %717 = vmatprep.subr.mxu0 0.0
    %718 = vmatpush1.msra.mxu0 %v703
    %719 = vmatprep.subr.mxu0 0.0
    %720 = vmatpush1.msra.mxu0 %v704
    %721 = vmatprep.subr.mxu0 0.0
    %722 = vmatpush1.msra.mxu0 %v705
    %723 = vmatprep.subr.mxu0 0.0
    %724 = vmatpush1.msra.mxu0 %v706
    %725 = vmatprep.subr.mxu0 0.0
    %726 = vmatpush1.msra.mxu0 0.0
    %727 = vmatprep.subr.mxu0 0.0
    %728 = vmatpush1.msra.mxu0 0.0
    %729 = vmatprep.subr.mxu0 0.0
    %730 = vmatpush1.msra.mxu0 0.0
    %731 = vmatprep.subr.mxu0 0.0
    %732 = vmatpush1.msra.mxu0 0.0
    %733 = vmatprep.subr.mxu0 0.0
    %734 = vmatpush1.msra.mxu0 0.0
    %735 = vmatprep.subr.mxu0 0.0
    %736 = vmatpush1.msra.mxu0 0.0
    %737 = vmatprep.subr.mxu0 0.0
    %738 = vmatpush1.msra.mxu0 0.0
    %739 = vmatprep.subr.mxu0 0.0
    %740 = vmatpush1.msra.mxu0 0.0
    %741 = vmatprep.subr.mxu0 0.0
    %742 = vmatpush1.msra.mxu0 0.0
    %743 = vmatprep.subr.mxu0 0.0
    %744 = vmatpush1.msra.mxu0 0.0
    %745 = vmatprep.subr.mxu0 0.0
    %746 = vmatpush1.msra.mxu0 0.0
    %747 = vmatprep.subr.mxu0 0.0
    %748 = vmatpush1.msra.mxu0 0.0
    %749 = vmatprep.subr.mxu0 0.0
    %750 = vmatpush1.msra.mxu0 0.0
    %751 = vmatprep.subr.mxu0 0.0
    %752 = vmatpush1.msra.mxu0 0.0
    %753 = vmatprep.subr.mxu0 0.0
    %754 = vmatpush1.msra.mxu0 0.0
    %755 = vmatprep.subr.mxu0 0.0
    %756 = vmatpush1.msra.mxu0 0.0
    %757 = vmatprep.subr.mxu0 0.0
    %758 = vmatpush1.msra.mxu0 0.0
    %759 = vmatprep.subr.mxu0 0.0
    %760 = vmatpush1.msra.mxu0 0.0
    %761 = vmatprep.subr.mxu0 0.0
    %762 = vmatpush1.msra.mxu0 0.0
    %763 = vmatprep.subr.mxu0 0.0
    %764 = vmatpush1.msra.mxu0 0.0
    %765 = vmatprep.subr.mxu0 0.0
    %766 = vmatpush1.msra.mxu0 0.0
    %767 = vmatprep.subr.mxu0 0.0
    %768 = vmatpush1.msra.mxu0 0.0
    %769 = vmatprep.subr.mxu0 0.0
    %770 = vmatpush1.msra.mxu0 0.0
    %771 = vmatprep.subr.mxu0 0.0
    %772 = vmatpush1.msra.mxu0 0.0
    %773 = vmatprep.subr.mxu0 0.0
    %774 = vmatpush1.msra.mxu0 0.0
    %775 = vmatprep.subr.mxu0 0.0
    %776 = vmatpush1.msra.mxu0 0.0
    %777 = vmatprep.subr.mxu0 0.0
    %778 = vmatpush1.msra.mxu0 0.0
    %779 = vmatprep.subr.mxu0 0.0
    %780 = vmatpush1.msra.mxu0 0.0
    %781 = vmatprep.mubr.f32.mxu0 0.0
    %782 = vmatmul.mubr.f32.gmra.mrb[0].mxu0 %v715
    %v783 = vpop.f32.mrb[0].mxu0
    %v784 = vadd.f32 %v712, %v783
    %v785 = vpop.f32.mrb[0].mxu0
    %786 = vdwg.mxu0
    %v787 = vld [vmem:[%s7] sm:$0xff]
    %v788 = vld [vmem:[%s7 + $0x8] sm:$0xff]
    %v789 = vld [vmem:[%s7 + $0x10] sm:$0xff]
    %v790 = vld [vmem:[%s7 + $0x18] sm:$0xff]
    %v791 = vld [vmem:[%s8] sm:$0xff]
    %v792 = vld [vmem:[%s8 + $0x8] sm:$0xff]
    %v793 = vld [vmem:[%s8 + $0x10] sm:$0xff]
    %v794 = vld [vmem:[%s8 + $0x18] sm:$0xff]
    %796 = vset.pattern.permute.xlu0 0
    %797 = vperm.xlu0 %796, %v791
    %v798 = vpop.permute.xlu0 %797
    %801 = vset.pattern.permute.xlu0 0
    %802 = vperm.xlu0 %801, %v792
    %v803 = vpop.permute.xlu0 %802
    %806 = vset.pattern.permute.xlu0 0
    %807 = vperm.xlu0 %806, %v793
    %v808 = vpop.permute.xlu0 %807
    %811 = vset.pattern.permute.xlu0 0
    %812 = vperm.xlu0 %811, %v794
    %v813 = vpop.permute.xlu0 %812
    %v816 = vsel %vm79, %v787, 0
    %v819 = vsel %vm79, %v788, 0
    %v822 = vsel %vm79, %v789, 0
    %v825 = vsel %vm79, %v790, 0
    %827 = vmatprep.subr.mxu0 0.0
    %828 = vmatpush1.msra.mxu0 %v93
    %829 = vmatprep.subr.mxu0 0.0
    %830 = vmatpush1.msra.mxu0 0.0
    %831 = vmatprep.subr.mxu0 0.0
    %832 = vmatpush1.msra.mxu0 0.0
    %833 = vmatprep.subr.mxu0 0.0
    %834 = vmatpush1.msra.mxu0 0.0
    %835 = vmatprep.subr.mxu0 0.0
    %836 = vmatpush1.msra.mxu0 0.0
    %837 = vmatprep.subr.mxu0 0.0
    %838 = vmatpush1.msra.mxu0 0.0
    %839 = vmatprep.subr.mxu0 0.0
    %840 = vmatpush1.msra.mxu0 0.0
    %841 = vmatprep.subr.mxu0 0.0
    %842 = vmatpush1.msra.mxu0 0.0
    %843 = vmatprep.subr.mxu0 0.0
    %844 = vmatpush1.msra.mxu0 0.0
    %845 = vmatprep.subr.mxu0 0.0
    %846 = vmatpush1.msra.mxu0 0.0
    %847 = vmatprep.subr.mxu0 0.0
    %848 = vmatpush1.msra.mxu0 0.0
    %849 = vmatprep.subr.mxu0 0.0
    %850 = vmatpush1.msra.mxu0 0.0
    %851 = vmatprep.subr.mxu0 0.0
    %852 = vmatpush1.msra.mxu0 0.0
    %853 = vmatprep.subr.mxu0 0.0
    %854 = vmatpush1.msra.mxu0 0.0
    %855 = vmatprep.subr.mxu0 0.0
    %856 = vmatpush1.msra.mxu0 0.0
    %857 = vmatprep.subr.mxu0 0.0
    %858 = vmatpush1.msra.mxu0 0.0
    %859 = vmatprep.subr.mxu0 0.0
    %860 = vmatpush1.msra.mxu0 0.0
    %861 = vmatprep.subr.mxu0 0.0
    %862 = vmatpush1.msra.mxu0 0.0
    %863 = vmatprep.subr.mxu0 0.0
    %864 = vmatpush1.msra.mxu0 0.0
    %865 = vmatprep.subr.mxu0 0.0
    %866 = vmatpush1.msra.mxu0 0.0
    %867 = vmatprep.subr.mxu0 0.0
    %868 = vmatpush1.msra.mxu0 0.0
    %869 = vmatprep.subr.mxu0 0.0
    %870 = vmatpush1.msra.mxu0 0.0
    %871 = vmatprep.subr.mxu0 0.0
    %872 = vmatpush1.msra.mxu0 0.0
    %873 = vmatprep.subr.mxu0 0.0
    %874 = vmatpush1.msra.mxu0 0.0
    %875 = vmatprep.subr.mxu0 0.0
    %876 = vmatpush1.msra.mxu0 0.0
    %877 = vmatprep.subr.mxu0 0.0
    %878 = vmatpush1.msra.mxu0 0.0
    %879 = vmatprep.subr.mxu0 0.0
    %880 = vmatpush1.msra.mxu0 0.0
    %881 = vmatprep.subr.mxu0 0.0
    %882 = vmatpush1.msra.mxu0 0.0
    %883 = vmatprep.subr.mxu0 0.0
    %884 = vmatpush1.msra.mxu0 0.0
    %885 = vmatprep.subr.mxu0 0.0
    %886 = vmatpush1.msra.mxu0 0.0
    %887 = vmatprep.subr.mxu0 0.0
    %888 = vmatpush1.msra.mxu0 0.0
    %889 = vmatprep.subr.mxu0 0.0
    %890 = vmatpush1.msra.mxu0 0.0
    %891 = vmatprep.mubr.f32.mxu0 0.0
    %892 = vmatmul.mubr.f32.gmra.mrb[0].mxu0 %v816
    %v893 = vpop.f32.mrb[0].mxu0
    %v894 = vadd.f32 %v798, %v893
    %v895 = vpop.f32.mrb[0].mxu0
    %896 = vmatprep.mubr.f32.mxu0 0.0
    %897 = vmatmul.mubr.f32.gmra.mrb[0].mxu0 %v819
    %v898 = vpop.f32.mrb[0].mxu0
    %v899 = vadd.f32 %v803, %v898
    %v900 = vpop.f32.mrb[0].mxu0
    %901 = vmatprep.mubr.f32.mxu0 0.0
    %902 = vmatmul.mubr.f32.gmra.mrb[0].mxu0 %v822
    %v903 = vpop.f32.mrb[0].mxu0
    %v904 = vadd.f32 %v808, %v903
    %v905 = vpop.f32.mrb[0].mxu0
    %906 = vmatprep.mubr.f32.mxu0 0.0
    %907 = vmatmul.mubr.f32.gmra.mrb[0].mxu0 %v825
    %v908 = vpop.f32.mrb[0].mxu0
    %v909 = vadd.f32 %v813, %v908
    %v910 = vpop.f32.mrb[0].mxu0
    %911 = vdwg.mxu0
    %v912 = vmax.f32 %v894, 0.0
    %v913 = vmax.f32 %v899, 0.0
    %v914 = vmax.f32 %v904, 0.0
    %v915 = vmax.f32 %v909, 0.0
    %v916 = vld [vmem:[%s9] sm:$0xff]
    %v917 = vld [vmem:[%s9 + $0x8] sm:$0xff]
    %v918 = vld [vmem:[%s9 + $0x10] sm:$0xff]
    %v919 = vld [vmem:[%s9 + $0x18] sm:$0xff]
    %v920 = vld [vmem:[%s10] sm:$0xff]
    %v921 = vld [vmem:[%s10 + $0x8] sm:$0xff]
    %v922 = vld [vmem:[%s10 + $0x10] sm:$0xff]
    %v923 = vld [vmem:[%s10 + $0x18] sm:$0xff]
    %925 = vset.pattern.permute.xlu0 0
    %926 = vperm.xlu0 %925, %v920
    %v927 = vpop.permute.xlu0 %926
    %930 = vset.pattern.permute.xlu0 0
    %931 = vperm.xlu0 %930, %v921
    %v932 = vpop.permute.xlu0 %931
    %935 = vset.pattern.permute.xlu0 0
    %936 = vperm.xlu0 %935, %v922
    %v937 = vpop.permute.xlu0 %936
    %940 = vset.pattern.permute.xlu0 0
    %941 = vperm.xlu0 %940, %v923
    %v942 = vpop.permute.xlu0 %941
    %v945 = vsel %vm212, %v916, 0
    %v948 = vsel %vm212, %v917, 0
    %v951 = vsel %vm212, %v918, 0
    %v954 = vsel %vm212, %v919, 0
    %956 = vmatprep.subr.mxu0 0.0
    %957 = vmatpush1.msra.mxu0 %v912
    %958 = vmatprep.subr.mxu0 0.0
    %959 = vmatpush1.msra.mxu0 %v913
    %960 = vmatprep.subr.mxu0 0.0
    %961 = vmatpush1.msra.mxu0 %v914
    %962 = vmatprep.subr.mxu0 0.0
    %963 = vmatpush1.msra.mxu0 %v915
    %964 = vmatprep.subr.mxu0 0.0
    %965 = vmatpush1.msra.mxu0 0.0
    %966 = vmatprep.subr.mxu0 0.0
    %967 = vmatpush1.msra.mxu0 0.0
    %968 = vmatprep.subr.mxu0 0.0
    %969 = vmatpush1.msra.mxu0 0.0
    %970 = vmatprep.subr.mxu0 0.0
    %971 = vmatpush1.msra.mxu0 0.0
    %972 = vmatprep.subr.mxu0 0.0
    %973 = vmatpush1.msra.mxu0 0.0
    %974 = vmatprep.subr.mxu0 0.0
    %975 = vmatpush1.msra.mxu0 0.0
    %976 = vmatprep.subr.mxu0 0.0
    %977 = vmatpush1.msra.mxu0 0.0
    %978 = vmatprep.subr.mxu0 0.0
    %979 = vmatpush1.msra.mxu0 0.0
    %980 = vmatprep.subr.mxu0 0.0
    %981 = vmatpush1.msra.mxu0 0.0
    %982 = vmatprep.subr.mxu0 0.0
    %983 = vmatpush1.msra.mxu0 0.0
    %984 = vmatprep.subr.mxu0 0.0
    %985 = vmatpush1.msra.mxu0 0.0
    %986 = vmatprep.subr.mxu0 0.0
    %987 = vmatpush1.msra.mxu0 0.0
    %988 = vmatprep.subr.mxu0 0.0
    %989 = vmatpush1.msra.mxu0 0.0
    %990 = vmatprep.subr.mxu0 0.0
    %991 = vmatpush1.msra.mxu0 0.0
    %992 = vmatprep.subr.mxu0 0.0
    %993 = vmatpush1.msra.mxu0 0.0
    %994 = vmatprep.subr.mxu0 0.0
    %995 = vmatpush1.msra.mxu0 0.0
    %996 = vmatprep.subr.mxu0 0.0
    %997 = vmatpush1.msra.mxu0 0.0
    %998 = vmatprep.subr.mxu0 0.0
    %999 = vmatpush1.msra.mxu0 0.0
    %1000 = vmatprep.subr.mxu0 0.0
    %1001 = vmatpush1.msra.mxu0 0.0
    %1002 = vmatprep.subr.mxu0 0.0
    %1003 = vmatpush1.msra.mxu0 0.0
    %1004 = vmatprep.subr.mxu0 0.0
    %1005 = vmatpush1.msra.mxu0 0.0
    %1006 = vmatprep.subr.mxu0 0.0
    %1007 = vmatpush1.msra.mxu0 0.0
    %1008 = vmatprep.subr.mxu0 0.0
    %1009 = vmatpush1.msra.mxu0 0.0
    %1010 = vmatprep.subr.mxu0 0.0
    %1011 = vmatpush1.msra.mxu0 0.0
    %1012 = vmatprep.subr.mxu0 0.0
    %1013 = vmatpush1.msra.mxu0 0.0
    %1014 = vmatprep.subr.mxu0 0.0
    %1015 = vmatpush1.msra.mxu0 0.0
    %1016 = vmatprep.subr.mxu0 0.0
    %1017 = vmatpush1.msra.mxu0 0.0
    %1018 = vmatprep.subr.mxu0 0.0
    %1019 = vmatpush1.msra.mxu0 0.0
    %1020 = vmatprep.mubr.f32.mxu0 0.0
    %1021 = vmatmul.mubr.f32.gmra.mrb[0].mxu0 %v945
    %v1022 = vpop.f32.mrb[0].mxu0
    %v1023 = vadd.f32 %v927, %v1022
    %v1024 = vpop.f32.mrb[0].mxu0
    %1025 = vmatprep.mubr.f32.mxu0 0.0
    %1026 = vmatmul.mubr.f32.gmra.mrb[0].mxu0 %v948
    %v1027 = vpop.f32.mrb[0].mxu0
    %v1028 = vadd.f32 %v932, %v1027
    %v1029 = vpop.f32.mrb[0].mxu0
    %1030 = vmatprep.mubr.f32.mxu0 0.0
    %1031 = vmatmul.mubr.f32.gmra.mrb[0].mxu0 %v951
    %v1032 = vpop.f32.mrb[0].mxu0
    %v1033 = vadd.f32 %v937, %v1032
    %v1034 = vpop.f32.mrb[0].mxu0
    %1035 = vmatprep.mubr.f32.mxu0 0.0
    %1036 = vmatmul.mubr.f32.gmra.mrb[0].mxu0 %v954
    %v1037 = vpop.f32.mrb[0].mxu0
    %v1038 = vadd.f32 %v942, %v1037
    %v1039 = vpop.f32.mrb[0].mxu0
    %1040 = vdwg.mxu0
    %v1041 = vmax.f32 %v1023, 0.0
    %v1042 = vmax.f32 %v1028, 0.0
    %v1043 = vmax.f32 %v1033, 0.0
    %v1044 = vmax.f32 %v1038, 0.0
    %s1045 = scalar_lea.vmem %s9, 32
    %v1046 = vld [vmem:[%s1045] sm:$0xff]
    %v1047 = vld [vmem:[%s1045 + $0x8] sm:$0xff]
    %v1048 = vld [vmem:[%s1045 + $0x10] sm:$0xff]
    %v1049 = vld [vmem:[%s1045 + $0x18] sm:$0xff]
    %s1050 = scalar_lea.vmem %s10, 32
    %v1051 = vld [vmem:[%s1050] sm:$0xff]
    %v1052 = vld [vmem:[%s1050 + $0x8] sm:$0xff]
    %v1053 = vld [vmem:[%s1050 + $0x10] sm:$0xff]
    %v1054 = vld [vmem:[%s1050 + $0x18] sm:$0xff]
    %1056 = vset.pattern.permute.xlu0 0
    %1057 = vperm.xlu0 %1056, %v1051
    %v1058 = vpop.permute.xlu0 %1057
    %1061 = vset.pattern.permute.xlu0 0
    %1062 = vperm.xlu0 %1061, %v1052
    %v1063 = vpop.permute.xlu0 %1062
    %1066 = vset.pattern.permute.xlu0 0
    %1067 = vperm.xlu0 %1066, %v1053
    %v1068 = vpop.permute.xlu0 %1067
    %1071 = vset.pattern.permute.xlu0 0
    %1072 = vperm.xlu0 %1071, %v1054
    %v1073 = vpop.permute.xlu0 %1072
    %v1076 = vsel %vm212, %v1046, 0
    %v1079 = vsel %vm212, %v1047, 0
    %v1082 = vsel %vm212, %v1048, 0
    %v1085 = vsel %vm212, %v1049, 0
    %1087 = vmatprep.subr.mxu0 0.0
    %1088 = vmatpush1.msra.mxu0 %v1041
    %1089 = vmatprep.subr.mxu0 0.0
    %1090 = vmatpush1.msra.mxu0 %v1042
    %1091 = vmatprep.subr.mxu0 0.0
    %1092 = vmatpush1.msra.mxu0 %v1043
    %1093 = vmatprep.subr.mxu0 0.0
    %1094 = vmatpush1.msra.mxu0 %v1044
    %1095 = vmatprep.subr.mxu0 0.0
    %1096 = vmatpush1.msra.mxu0 0.0
    %1097 = vmatprep.subr.mxu0 0.0
    %1098 = vmatpush1.msra.mxu0 0.0
    %1099 = vmatprep.subr.mxu0 0.0
    %1100 = vmatpush1.msra.mxu0 0.0
    %1101 = vmatprep.subr.mxu0 0.0
    %1102 = vmatpush1.msra.mxu0 0.0
    %1103 = vmatprep.subr.mxu0 0.0
    %1104 = vmatpush1.msra.mxu0 0.0
    %1105 = vmatprep.subr.mxu0 0.0
    %1106 = vmatpush1.msra.mxu0 0.0
    %1107 = vmatprep.subr.mxu0 0.0
    %1108 = vmatpush1.msra.mxu0 0.0
    %1109 = vmatprep.subr.mxu0 0.0
    %1110 = vmatpush1.msra.mxu0 0.0
    %1111 = vmatprep.subr.mxu0 0.0
    %1112 = vmatpush1.msra.mxu0 0.0
    %1113 = vmatprep.subr.mxu0 0.0
    %1114 = vmatpush1.msra.mxu0 0.0
    %1115 = vmatprep.subr.mxu0 0.0
    %1116 = vmatpush1.msra.mxu0 0.0
    %1117 = vmatprep.subr.mxu0 0.0
    %1118 = vmatpush1.msra.mxu0 0.0
    %1119 = vmatprep.subr.mxu0 0.0
    %1120 = vmatpush1.msra.mxu0 0.0
    %1121 = vmatprep.subr.mxu0 0.0
    %1122 = vmatpush1.msra.mxu0 0.0
    %1123 = vmatprep.subr.mxu0 0.0
    %1124 = vmatpush1.msra.mxu0 0.0
    %1125 = vmatprep.subr.mxu0 0.0
    %1126 = vmatpush1.msra.mxu0 0.0
    %1127 = vmatprep.subr.mxu0 0.0
    %1128 = vmatpush1.msra.mxu0 0.0
    %1129 = vmatprep.subr.mxu0 0.0
    %1130 = vmatpush1.msra.mxu0 0.0
    %1131 = vmatprep.subr.mxu0 0.0
    %1132 = vmatpush1.msra.mxu0 0.0
    %1133 = vmatprep.subr.mxu0 0.0
    %1134 = vmatpush1.msra.mxu0 0.0
    %1135 = vmatprep.subr.mxu0 0.0
    %1136 = vmatpush1.msra.mxu0 0.0
    %1137 = vmatprep.subr.mxu0 0.0
    %1138 = vmatpush1.msra.mxu0 0.0
    %1139 = vmatprep.subr.mxu0 0.0
    %1140 = vmatpush1.msra.mxu0 0.0
    %1141 = vmatprep.subr.mxu0 0.0
    %1142 = vmatpush1.msra.mxu0 0.0
    %1143 = vmatprep.subr.mxu0 0.0
    %1144 = vmatpush1.msra.mxu0 0.0
    %1145 = vmatprep.subr.mxu0 0.0
    %1146 = vmatpush1.msra.mxu0 0.0
    %1147 = vmatprep.subr.mxu0 0.0
    %1148 = vmatpush1.msra.mxu0 0.0
    %1149 = vmatprep.subr.mxu0 0.0
    %1150 = vmatpush1.msra.mxu0 0.0
    %1151 = vmatprep.mubr.f32.mxu0 0.0
    %1152 = vmatmul.mubr.f32.gmra.mrb[0].mxu0 %v1076
    %v1153 = vpop.f32.mrb[0].mxu0
    %v1154 = vadd.f32 %v1058, %v1153
    %v1155 = vpop.f32.mrb[0].mxu0
    %1156 = vmatprep.mubr.f32.mxu0 0.0
    %1157 = vmatmul.mubr.f32.gmra.mrb[0].mxu0 %v1079
    %v1158 = vpop.f32.mrb[0].mxu0
    %v1159 = vadd.f32 %v1063, %v1158
    %v1160 = vpop.f32.mrb[0].mxu0
    %1161 = vmatprep.mubr.f32.mxu0 0.0
    %1162 = vmatmul.mubr.f32.gmra.mrb[0].mxu0 %v1082
    %v1163 = vpop.f32.mrb[0].mxu0
    %v1164 = vadd.f32 %v1068, %v1163
    %v1165 = vpop.f32.mrb[0].mxu0
    %1166 = vmatprep.mubr.f32.mxu0 0.0
    %1167 = vmatmul.mubr.f32.gmra.mrb[0].mxu0 %v1085
    %v1168 = vpop.f32.mrb[0].mxu0
    %v1169 = vadd.f32 %v1073, %v1168
    %v1170 = vpop.f32.mrb[0].mxu0
    %1171 = vdwg.mxu0
    %v1172 = vmax.f32 %v1154, 0.0
    %v1173 = vmax.f32 %v1159, 0.0
    %v1174 = vmax.f32 %v1164, 0.0
    %v1175 = vmax.f32 %v1169, 0.0
    %s1176 = scalar_lea.vmem %s9, 64
    %v1177 = vld [vmem:[%s1176] sm:$0xff]
    %v1178 = vld [vmem:[%s1176 + $0x8] sm:$0xff]
    %v1179 = vld [vmem:[%s1176 + $0x10] sm:$0xff]
    %v1180 = vld [vmem:[%s1176 + $0x18] sm:$0xff]
    %s1181 = scalar_lea.vmem %s10, 64
    %v1182 = vld [vmem:[%s1181] sm:$0xff]
    %v1183 = vld [vmem:[%s1181 + $0x8] sm:$0xff]
    %v1184 = vld [vmem:[%s1181 + $0x10] sm:$0xff]
    %v1185 = vld [vmem:[%s1181 + $0x18] sm:$0xff]
    %1187 = vset.pattern.permute.xlu0 0
    %1188 = vperm.xlu0 %1187, %v1182
    %v1189 = vpop.permute.xlu0 %1188
    %1192 = vset.pattern.permute.xlu0 0
    %1193 = vperm.xlu0 %1192, %v1183
    %v1194 = vpop.permute.xlu0 %1193
    %1197 = vset.pattern.permute.xlu0 0
    %1198 = vperm.xlu0 %1197, %v1184
    %v1199 = vpop.permute.xlu0 %1198
    %1202 = vset.pattern.permute.xlu0 0
    %1203 = vperm.xlu0 %1202, %v1185
    %v1204 = vpop.permute.xlu0 %1203
    %v1207 = vsel %vm212, %v1177, 0
    %v1210 = vsel %vm212, %v1178, 0
    %v1213 = vsel %vm212, %v1179, 0
    %v1216 = vsel %vm212, %v1180, 0
    %1218 = vmatprep.subr.mxu0 0.0
    %1219 = vmatpush1.msra.mxu0 %v1172
    %1220 = vmatprep.subr.mxu0 0.0
    %1221 = vmatpush1.msra.mxu0 %v1173
    %1222 = vmatprep.subr.mxu0 0.0
    %1223 = vmatpush1.msra.mxu0 %v1174
    %1224 = vmatprep.subr.mxu0 0.0
    %1225 = vmatpush1.msra.mxu0 %v1175
    %1226 = vmatprep.subr.mxu0 0.0
    %1227 = vmatpush1.msra.mxu0 0.0
    %1228 = vmatprep.subr.mxu0 0.0
    %1229 = vmatpush1.msra.mxu0 0.0
    %1230 = vmatprep.subr.mxu0 0.0
    %1231 = vmatpush1.msra.mxu0 0.0
    %1232 = vmatprep.subr.mxu0 0.0
    %1233 = vmatpush1.msra.mxu0 0.0
    %1234 = vmatprep.subr.mxu0 0.0
    %1235 = vmatpush1.msra.mxu0 0.0
    %1236 = vmatprep.subr.mxu0 0.0
    %1237 = vmatpush1.msra.mxu0 0.0
    %1238 = vmatprep.subr.mxu0 0.0
    %1239 = vmatpush1.msra.mxu0 0.0
    %1240 = vmatprep.subr.mxu0 0.0
    %1241 = vmatpush1.msra.mxu0 0.0
    %1242 = vmatprep.subr.mxu0 0.0
    %1243 = vmatpush1.msra.mxu0 0.0
    %1244 = vmatprep.subr.mxu0 0.0
    %1245 = vmatpush1.msra.mxu0 0.0
    %1246 = vmatprep.subr.mxu0 0.0
    %1247 = vmatpush1.msra.mxu0 0.0
    %1248 = vmatprep.subr.mxu0 0.0
    %1249 = vmatpush1.msra.mxu0 0.0
    %1250 = vmatprep.subr.mxu0 0.0
    %1251 = vmatpush1.msra.mxu0 0.0
    %1252 = vmatprep.subr.mxu0 0.0
    %1253 = vmatpush1.msra.mxu0 0.0
    %1254 = vmatprep.subr.mxu0 0.0
    %1255 = vmatpush1.msra.mxu0 0.0
    %1256 = vmatprep.subr.mxu0 0.0
    %1257 = vmatpush1.msra.mxu0 0.0
    %1258 = vmatprep.subr.mxu0 0.0
    %1259 = vmatpush1.msra.mxu0 0.0
    %1260 = vmatprep.subr.mxu0 0.0
    %1261 = vmatpush1.msra.mxu0 0.0
    %1262 = vmatprep.subr.mxu0 0.0
    %1263 = vmatpush1.msra.mxu0 0.0
    %1264 = vmatprep.subr.mxu0 0.0
    %1265 = vmatpush1.msra.mxu0 0.0
    %1266 = vmatprep.subr.mxu0 0.0
    %1267 = vmatpush1.msra.mxu0 0.0
    %1268 = vmatprep.subr.mxu0 0.0
    %1269 = vmatpush1.msra.mxu0 0.0
    %1270 = vmatprep.subr.mxu0 0.0
    %1271 = vmatpush1.msra.mxu0 0.0
    %1272 = vmatprep.subr.mxu0 0.0
    %1273 = vmatpush1.msra.mxu0 0.0
    %1274 = vmatprep.subr.mxu0 0.0
    %1275 = vmatpush1.msra.mxu0 0.0
    %1276 = vmatprep.subr.mxu0 0.0
    %1277 = vmatpush1.msra.mxu0 0.0
    %1278 = vmatprep.subr.mxu0 0.0
    %1279 = vmatpush1.msra.mxu0 0.0
    %1280 = vmatprep.subr.mxu0 0.0
    %1281 = vmatpush1.msra.mxu0 0.0
    %1282 = vmatprep.mubr.f32.mxu0 0.0
    %1283 = vmatmul.mubr.f32.gmra.mrb[0].mxu0 %v1207
    %v1284 = vpop.f32.mrb[0].mxu0
    %v1285 = vadd.f32 %v1189, %v1284
    %v1286 = vpop.f32.mrb[0].mxu0
    %1287 = vmatprep.mubr.f32.mxu0 0.0
    %1288 = vmatmul.mubr.f32.gmra.mrb[0].mxu0 %v1210
    %v1289 = vpop.f32.mrb[0].mxu0
    %v1290 = vadd.f32 %v1194, %v1289
    %v1291 = vpop.f32.mrb[0].mxu0
    %1292 = vmatprep.mubr.f32.mxu0 0.0
    %1293 = vmatmul.mubr.f32.gmra.mrb[0].mxu0 %v1213
    %v1294 = vpop.f32.mrb[0].mxu0
    %v1295 = vadd.f32 %v1199, %v1294
    %v1296 = vpop.f32.mrb[0].mxu0
    %1297 = vmatprep.mubr.f32.mxu0 0.0
    %1298 = vmatmul.mubr.f32.gmra.mrb[0].mxu0 %v1216
    %v1299 = vpop.f32.mrb[0].mxu0
    %v1300 = vadd.f32 %v1204, %v1299
    %v1301 = vpop.f32.mrb[0].mxu0
    %1302 = vdwg.mxu0
    %v1303 = vmax.f32 %v1285, 0.0
    %v1304 = vmax.f32 %v1290, 0.0
    %v1305 = vmax.f32 %v1295, 0.0
    %v1306 = vmax.f32 %v1300, 0.0
    %s1307 = scalar_lea.vmem %s9, 96
    %v1308 = vld [vmem:[%s1307] sm:$0xff]
    %v1309 = vld [vmem:[%s1307 + $0x8] sm:$0xff]
    %v1310 = vld [vmem:[%s1307 + $0x10] sm:$0xff]
    %v1311 = vld [vmem:[%s1307 + $0x18] sm:$0xff]
    %s1312 = scalar_lea.vmem %s10, 96
    %v1313 = vld [vmem:[%s1312] sm:$0xff]
    %v1314 = vld [vmem:[%s1312 + $0x8] sm:$0xff]
    %v1315 = vld [vmem:[%s1312 + $0x10] sm:$0xff]
    %v1316 = vld [vmem:[%s1312 + $0x18] sm:$0xff]
    %1318 = vset.pattern.permute.xlu0 0
    %1319 = vperm.xlu0 %1318, %v1313
    %v1320 = vpop.permute.xlu0 %1319
    %1323 = vset.pattern.permute.xlu0 0
    %1324 = vperm.xlu0 %1323, %v1314
    %v1325 = vpop.permute.xlu0 %1324
    %1328 = vset.pattern.permute.xlu0 0
    %1329 = vperm.xlu0 %1328, %v1315
    %v1330 = vpop.permute.xlu0 %1329
    %1333 = vset.pattern.permute.xlu0 0
    %1334 = vperm.xlu0 %1333, %v1316
    %v1335 = vpop.permute.xlu0 %1334
    %v1338 = vsel %vm212, %v1308, 0
    %v1341 = vsel %vm212, %v1309, 0
    %v1344 = vsel %vm212, %v1310, 0
    %v1347 = vsel %vm212, %v1311, 0
    %1349 = vmatprep.subr.mxu0 0.0
    %1350 = vmatpush1.msra.mxu0 %v1303
    %1351 = vmatprep.subr.mxu0 0.0
    %1352 = vmatpush1.msra.mxu0 %v1304
    %1353 = vmatprep.subr.mxu0 0.0
    %1354 = vmatpush1.msra.mxu0 %v1305
    %1355 = vmatprep.subr.mxu0 0.0
    %1356 = vmatpush1.msra.mxu0 %v1306
    %1357 = vmatprep.subr.mxu0 0.0
    %1358 = vmatpush1.msra.mxu0 0.0
    %1359 = vmatprep.subr.mxu0 0.0
    %1360 = vmatpush1.msra.mxu0 0.0
    %1361 = vmatprep.subr.mxu0 0.0
    %1362 = vmatpush1.msra.mxu0 0.0
    %1363 = vmatprep.subr.mxu0 0.0
    %1364 = vmatpush1.msra.mxu0 0.0
    %1365 = vmatprep.subr.mxu0 0.0
    %1366 = vmatpush1.msra.mxu0 0.0
    %1367 = vmatprep.subr.mxu0 0.0
    %1368 = vmatpush1.msra.mxu0 0.0
    %1369 = vmatprep.subr.mxu0 0.0
    %1370 = vmatpush1.msra.mxu0 0.0
    %1371 = vmatprep.subr.mxu0 0.0
    %1372 = vmatpush1.msra.mxu0 0.0
    %1373 = vmatprep.subr.mxu0 0.0
    %1374 = vmatpush1.msra.mxu0 0.0
    %1375 = vmatprep.subr.mxu0 0.0
    %1376 = vmatpush1.msra.mxu0 0.0
    %1377 = vmatprep.subr.mxu0 0.0
    %1378 = vmatpush1.msra.mxu0 0.0
    %1379 = vmatprep.subr.mxu0 0.0
    %1380 = vmatpush1.msra.mxu0 0.0
    %1381 = vmatprep.subr.mxu0 0.0
    %1382 = vmatpush1.msra.mxu0 0.0
    %1383 = vmatprep.subr.mxu0 0.0
    %1384 = vmatpush1.msra.mxu0 0.0
    %1385 = vmatprep.subr.mxu0 0.0
    %1386 = vmatpush1.msra.mxu0 0.0
    %1387 = vmatprep.subr.mxu0 0.0
    %1388 = vmatpush1.msra.mxu0 0.0
    %1389 = vmatprep.subr.mxu0 0.0
    %1390 = vmatpush1.msra.mxu0 0.0
    %1391 = vmatprep.subr.mxu0 0.0
    %1392 = vmatpush1.msra.mxu0 0.0
    %1393 = vmatprep.subr.mxu0 0.0
    %1394 = vmatpush1.msra.mxu0 0.0
    %1395 = vmatprep.subr.mxu0 0.0
    %1396 = vmatpush1.msra.mxu0 0.0
    %1397 = vmatprep.subr.mxu0 0.0
    %1398 = vmatpush1.msra.mxu0 0.0
    %1399 = vmatprep.subr.mxu0 0.0
    %1400 = vmatpush1.msra.mxu0 0.0
    %1401 = vmatprep.subr.mxu0 0.0
    %1402 = vmatpush1.msra.mxu0 0.0
    %1403 = vmatprep.subr.mxu0 0.0
    %1404 = vmatpush1.msra.mxu0 0.0
    %1405 = vmatprep.subr.mxu0 0.0
    %1406 = vmatpush1.msra.mxu0 0.0
    %1407 = vmatprep.subr.mxu0 0.0
    %1408 = vmatpush1.msra.mxu0 0.0
    %1409 = vmatprep.subr.mxu0 0.0
    %1410 = vmatpush1.msra.mxu0 0.0
    %1411 = vmatprep.subr.mxu0 0.0
    %1412 = vmatpush1.msra.mxu0 0.0
    %1413 = vmatprep.mubr.f32.mxu0 0.0
    %1414 = vmatmul.mubr.f32.gmra.mrb[0].mxu0 %v1338
    %v1415 = vpop.f32.mrb[0].mxu0
    %v1416 = vadd.f32 %v1320, %v1415
    %v1417 = vpop.f32.mrb[0].mxu0
    %1418 = vmatprep.mubr.f32.mxu0 0.0
    %1419 = vmatmul.mubr.f32.gmra.mrb[0].mxu0 %v1341
    %v1420 = vpop.f32.mrb[0].mxu0
    %v1421 = vadd.f32 %v1325, %v1420
    %v1422 = vpop.f32.mrb[0].mxu0
    %1423 = vmatprep.mubr.f32.mxu0 0.0
    %1424 = vmatmul.mubr.f32.gmra.mrb[0].mxu0 %v1344
    %v1425 = vpop.f32.mrb[0].mxu0
    %v1426 = vadd.f32 %v1330, %v1425
    %v1427 = vpop.f32.mrb[0].mxu0
    %1428 = vmatprep.mubr.f32.mxu0 0.0
    %1429 = vmatmul.mubr.f32.gmra.mrb[0].mxu0 %v1347
    %v1430 = vpop.f32.mrb[0].mxu0
    %v1431 = vadd.f32 %v1335, %v1430
    %v1432 = vpop.f32.mrb[0].mxu0
    %1433 = vdwg.mxu0
    %v1434 = vmax.f32 %v1416, 0.0
    %v1435 = vmax.f32 %v1421, 0.0
    %v1436 = vmax.f32 %v1426, 0.0
    %v1437 = vmax.f32 %v1431, 0.0
    %v1438 = vld [vmem:[%s11] sm:$0x3]
    %v1439 = vld [vmem:[%s12] sm:$0x3]
    %1441 = vset.pattern.permute.xlu0 0
    %1442 = vperm.xlu0 %1441, %v1439
    %v1443 = vpop.permute.xlu0 %1442
    %v1446 = vsel %vm212, %v1438, 0
    %1448 = vmatprep.subr.mxu0 0.0
    %1449 = vmatpush1.msra.mxu0 %v1434
    %1450 = vmatprep.subr.mxu0 0.0
    %1451 = vmatpush1.msra.mxu0 %v1435
    %1452 = vmatprep.subr.mxu0 0.0
    %1453 = vmatpush1.msra.mxu0 %v1436
    %1454 = vmatprep.subr.mxu0 0.0
    %1455 = vmatpush1.msra.mxu0 %v1437
    %1456 = vmatprep.subr.mxu0 0.0
    %1457 = vmatpush1.msra.mxu0 0.0
    %1458 = vmatprep.subr.mxu0 0.0
    %1459 = vmatpush1.msra.mxu0 0.0
    %1460 = vmatprep.subr.mxu0 0.0
    %1461 = vmatpush1.msra.mxu0 0.0
    %1462 = vmatprep.subr.mxu0 0.0
    %1463 = vmatpush1.msra.mxu0 0.0
    %1464 = vmatprep.subr.mxu0 0.0
    %1465 = vmatpush1.msra.mxu0 0.0
    %1466 = vmatprep.subr.mxu0 0.0
    %1467 = vmatpush1.msra.mxu0 0.0
    %1468 = vmatprep.subr.mxu0 0.0
    %1469 = vmatpush1.msra.mxu0 0.0
    %1470 = vmatprep.subr.mxu0 0.0
    %1471 = vmatpush1.msra.mxu0 0.0
    %1472 = vmatprep.subr.mxu0 0.0
    %1473 = vmatpush1.msra.mxu0 0.0
    %1474 = vmatprep.subr.mxu0 0.0
    %1475 = vmatpush1.msra.mxu0 0.0
    %1476 = vmatprep.subr.mxu0 0.0
    %1477 = vmatpush1.msra.mxu0 0.0
    %1478 = vmatprep.subr.mxu0 0.0
    %1479 = vmatpush1.msra.mxu0 0.0
    %1480 = vmatprep.subr.mxu0 0.0
    %1481 = vmatpush1.msra.mxu0 0.0
    %1482 = vmatprep.subr.mxu0 0.0
    %1483 = vmatpush1.msra.mxu0 0.0
    %1484 = vmatprep.subr.mxu0 0.0
    %1485 = vmatpush1.msra.mxu0 0.0
    %1486 = vmatprep.subr.mxu0 0.0
    %1487 = vmatpush1.msra.mxu0 0.0
    %1488 = vmatprep.subr.mxu0 0.0
    %1489 = vmatpush1.msra.mxu0 0.0
    %1490 = vmatprep.subr.mxu0 0.0
    %1491 = vmatpush1.msra.mxu0 0.0
    %1492 = vmatprep.subr.mxu0 0.0
    %1493 = vmatpush1.msra.mxu0 0.0
    %1494 = vmatprep.subr.mxu0 0.0
    %1495 = vmatpush1.msra.mxu0 0.0
    %1496 = vmatprep.subr.mxu0 0.0
    %1497 = vmatpush1.msra.mxu0 0.0
    %1498 = vmatprep.subr.mxu0 0.0
    %1499 = vmatpush1.msra.mxu0 0.0
    %1500 = vmatprep.subr.mxu0 0.0
    %1501 = vmatpush1.msra.mxu0 0.0
    %1502 = vmatprep.subr.mxu0 0.0
    %1503 = vmatpush1.msra.mxu0 0.0
    %1504 = vmatprep.subr.mxu0 0.0
    %1505 = vmatpush1.msra.mxu0 0.0
    %1506 = vmatprep.subr.mxu0 0.0
    %1507 = vmatpush1.msra.mxu0 0.0
    %1508 = vmatprep.subr.mxu0 0.0
    %1509 = vmatpush1.msra.mxu0 0.0
    %1510 = vmatprep.subr.mxu0 0.0
    %1511 = vmatpush1.msra.mxu0 0.0
    %1512 = vmatprep.mubr.f32.mxu0 0.0
    %1513 = vmatmul.mubr.f32.gmra.mrb[0].mxu0 %v1446
    %v1514 = vpop.f32.mrb[0].mxu0
    %v1515 = vadd.f32 %v1443, %v1514
    %v1516 = vpop.f32.mrb[0].mxu0
    %1517 = vdwg.mxu0
    %1518 = vst [vmem:[#allocation2] sm:$0x7] %v784
    %v1519 = vadd.f32 %v1515, %v48
    %1520 = vst [vmem:[#allocation4] sm:$0x3] %v1519
    // Predicated region
    $region54: #{tpu_custom_call.1} parent=1 // pred_check
      _
    $region55: #{tpu_custom_call.1} parent=1 // pred_check_branch
      %1522 = sbr.rel (0) target = $region57
    $region56: #{tpu_custom_call.1} parent=1 // pred_region
      %s1524 = ssub.s32 64, 64
      %1525 = vsyncadd [#allocation3], %s1524
      %s1527 = sshll.u32 [#allocation2], 4
      %s1528 = int_to_ptr.vmem [resolvable:$true] %s1527
      %1530 = dma.vmem_to_hbm [thread:$0]  %s1528, 64, %s13, [#allocation3]
    $region57: #{tpu_custom_call.1} parent=1 // pred_fallthru
      _
    // Predicated region
    $region58: #{tpu_custom_call.1} parent=1 // pred_check
      _
    $region59: #{tpu_custom_call.1} parent=1 // pred_check_branch
      %1532 = sbr.rel (0) target = $region61
    $region60: #{tpu_custom_call.1} parent=1 // pred_region
      %s1534 = ssub.s32 32, 32
      %1535 = vsyncadd [#allocation5], %s1534
      %s1537 = sshll.u32 [#allocation4], 4
      %s1538 = int_to_ptr.vmem [resolvable:$true] %s1537
      %1540 = dma.vmem_to_hbm [thread:$0]  %s1538, 32, %s14, [#allocation5]
    $region61: #{tpu_custom_call.1} parent=1 // pred_fallthru
      _
    // Predicated region
    $region62: #{tpu_custom_call.1} parent=1 // pred_check
      _
    $region63: #{tpu_custom_call.1} parent=1 // pred_check_branch
      %1542 = sbr.rel (0) target = $region65
    $region64: #{tpu_custom_call.1} parent=1 // pred_region
      %1543 = dma.done [#allocation3], 64
    $region65: #{tpu_custom_call.1} parent=1 // pred_fallthru
      _
    // Predicated region
    $region66: #{tpu_custom_call.1} parent=1 // pred_check
      _
    $region67: #{tpu_custom_call.1} parent=1 // pred_check_branch
      %1545 = sbr.rel (0) target = $region69
    $region68: #{tpu_custom_call.1} parent=1 // pred_region
      %1546 = dma.done [#allocation5], 32
    $region69: #{tpu_custom_call.1} parent=1 // pred_fallthru
      _
    %1547 = vsyncpa [#allocation3], 1
    %1548 = vsyncpa [#allocation5], 1

</llo_original>
